<compile_context>
chip_gen: v5e
topology: v5e:2x2
jax: 0.10.0
libtpu: 0.0.40
codegen_flags: <defaults>
</compile_context>

<pallas_src>
import math

import jax
import jax.numpy as jnp
from jax.experimental import pallas as pl
from jax.experimental.pallas import tpu as pltpu


_PREFIX_C = 0.044715 * 0.125            # folds (*0.5 then cube) and *0.044715
_SQRT_2_OVER_PI = 0.7978845608028654


def _fused_kernel(p_ref, w1t_ref, b1_ref, a_ref, b2_ref, o_ref):
    """One grid step: a block of images, positions grouped by output parity.

    p_ref : (8, K1, M)   conv1 im2col patches, K1 = 9*Cin, M = NB*Hh*Wh.
                          classes 0..3 -> output-parity positions (2y+py, 2x+px)
                          classes 4..7 -> shifted quadrant positions (y+dy, x+dx)
                          columns ordered (image, y, x).
    w1t_ref: (C1, K1)    conv_transpose1 as a correlation matrix (row = out ch)
    b1_ref : (C1, 1)
    a_ref  : (16, C1, C1) conv_transpose2 parity sub-kernels, A[q*4 + s]
    b2_ref : (C1, 1)      conv_transpose2 bias, channel-padded 6 -> 9 with zeros
    o_ref  : (4, C1, M)   final activation at output-parity positions
    """
    w1t = w1t_ref[...]
    b1 = b1_ref[...]
    b2 = b2_ref[...]

    def conv1_prefix(cls):
        c = jnp.dot(w1t, p_ref[cls], preferred_element_type=jnp.float32) + b1
        return (c * c) * (c * _PREFIX_C)        # == ((0.5*c)^3) * 0.044715

    # t at the four output-parity classes (needed for the residual add).
    t_par = [conv1_prefix(q) for q in range(4)]
    # t at the four shifted top-left quadrants (the only inputs conv_transpose2
    # needs once its output is cropped back to HxW).
    t_sft = [conv1_prefix(4 + s) for s in range(4)]

    for q in range(4):
        py, px = q // 2, q % 2
        res = b2
        for dy in range(py + 1):
            for dx in range(px + 1):
                s = dy * 2 + dx
                res = res + jnp.dot(a_ref[q * 4 + s], t_sft[s],
                                    preferred_element_type=jnp.float32)
        u = (t_par[q] + res) * _SQRT_2_OVER_PI
        u = jnp.tanh(u) + 1.0
        o_ref[q] = (u * u).astype(o_ref.dtype)


def prepare_params(w1, b1, w2, b2):
    """One-time weight preprocessing (hoisted out of the jitted forward)."""
    Cin, C1 = w1.shape[0], w1.shape[1]
    C2 = w2.shape[1]
    # conv_transpose1 -> correlation: w1t[o, (kh*3+kw)*Cin + ci] = w1[ci,o,2-kh,2-kw]
    w1f = w1[:, :, ::-1, ::-1]
    w1t = jnp.transpose(w1f, (1, 2, 3, 0)).reshape(C1, 9 * Cin).astype(jnp.float32)
    b1c = b1.reshape(C1, 1).astype(jnp.float32)

    # conv_transpose2 parity sub-kernels (output channels zero-padded 6 -> 9):
    #   A[(py*2+px)*4 + (dy*2+dx), o, c] = w2[c, o, 1+py-2*dy, 1+px-2*dx]
    A = jnp.zeros((16, C1, C1), jnp.float32)
    for py in range(2):
        for px in range(2):
            for dy in range(py + 1):
                for dx in range(px + 1):
                    idx = (py * 2 + px) * 4 + (dy * 2 + dx)
                    sub = w2[:, :, 1 + py - 2 * dy, 1 + px - 2 * dx]   # (C1, C2)
                    A = A.at[idx, :C2, :].set(jnp.transpose(sub).astype(jnp.float32))
    b2p = jnp.zeros((C1, 1), jnp.float32).at[:C2, 0].set(b2.astype(jnp.float32))
    return w1t, b1c, A, b2p


def _build_patches(x):
    """conv1 im2col patches, grouped by output parity / quadrant shift."""
    N, Cin, H, W = x.shape
    Hh, Wh = H // 2, W // 2
    xp = jnp.pad(x, ((0, 0), (0, 0), (1, 1), (1, 1)))
    taps = jnp.stack([xp[:, :, kh:kh + H, kw:kw + W]
                      for kh in range(3) for kw in range(3)], axis=0)  # (9,N,Cin,H,W)
    groups = []
    for py in range(2):                     # classes 0..3: parity positions
        for px in range(2):
            groups.append(taps[:, :, :, py::2, px::2])
    for dy in range(2):                     # classes 4..7: shifted quadrants
        for dx in range(2):
            groups.append(taps[:, :, :, dy:dy + Hh, dx:dx + Wh])
    p = jnp.stack(groups, axis=0)                       # (8, 9, N, Cin, Hh, Wh)
    p = jnp.transpose(p, (0, 1, 3, 2, 4, 5))            # (8, 9, Cin, N, Hh, Wh)
    return p.reshape(8, 9 * Cin, N * Hh * Wh)


@jax.jit
def model_forward(x, w1t, b1c, A, b2p):
    N, Cin, H, W = x.shape
    C1, K1 = w1t.shape
    assert H % 2 == 0 and W % 2 == 0, "kernel assumes even spatial dims"
    Hh, Wh = H // 2, W // 2
    spatial = Hh * Wh

    # Images per grid step: either the whole (small) batch in one step, or a
    # block whose lane width (nb*spatial) is a multiple of 128.
    nb0 = 128 // math.gcd(spatial, 128)
    if N <= nb0:
        nb, n_pad = N, N
    else:
        nb = nb0
        n_pad = ((N + nb - 1) // nb) * nb

    xf = x.astype(jnp.float32)
    if n_pad != N:
        xf = jnp.pad(xf, ((0, n_pad - N), (0, 0), (0, 0), (0, 0)))

    p = _build_patches(xf)                      # (8, K1, n_pad*spatial)
    m_total = n_pad * spatial
    m_blk = nb * spatial

    out = pl.pallas_call(
        _fused_kernel,
        out_shape=jax.ShapeDtypeStruct((4, C1, m_total), jnp.float32),
        grid=(m_total // m_blk,),
        in_specs=[
            pl.BlockSpec((8, K1, m_blk), lambda i: (0, 0, i)),
            pl.BlockSpec((C1, K1), lambda i: (0, 0)),
            pl.BlockSpec((C1, 1), lambda i: (0, 0)),
            pl.BlockSpec((16, C1, C1), lambda i: (0, 0, 0)),
            pl.BlockSpec((C1, 1), lambda i: (0, 0)),
        ],
        out_specs=pl.BlockSpec((4, C1, m_blk), lambda i: (0, 0, i)),
        compiler_params=pltpu.CompilerParams(
            dimension_semantics=("parallel",)),
    )(p, w1t, b1c, A, b2p)

    # (parity, C, n, y, x) -> (n, C, H, W): one cheap XLA depth-to-space.
    o = out.reshape(2, 2, C1, n_pad, Hh, Wh)
    o = jnp.transpose(o, (3, 2, 4, 0, 5, 1)).reshape(n_pad, C1, H, W)
    return o[:N]


def _ref_forward(x, w1, b1, w2, b2):
    """Pure-JAX (XLA) reference with the same documented residual resolution."""
    def conv_t(x, w, b, stride, padding, output_padding):
        k = w.shape[2]
        w_t = jnp.transpose(w[:, :, ::-1, ::-1], (1, 0, 2, 3))  # OIHW
        lo = k - 1 - padding
        hi = k - 1 - padding + output_padding
        y = jax.lax.conv_general_dilated(
            x, w_t, window_strides=(1, 1), padding=[(lo, hi), (lo, hi)],
            lhs_dilation=(stride, stride),
            dimension_numbers=("NCHW", "OIHW", "NCHW"))
        return y + b.reshape(1, -1, 1, 1)

    t = conv_t(x, w1, b1, 1, 1, 0)
    t = t * 0.5
    t = t * t * t
    t = t * 0.044715
    y2 = conv_t(t, w2, b2, 2, 1, 1)
    n, c1, h, w = t.shape
    res = jnp.pad(y2[:, :, :h, :w],
                  ((0, 0), (0, c1 - y2.shape[1]), (0, 0), (0, 0)))
    u = t + res
    u = u * 0.7978845608028654
    u = jnp.tanh(u)
    u = u + 1.0
    return u * u


if __name__ == "__main__":
    key = jax.random.PRNGKey(0)
    kx, kw1, kb1, kw2, kb2 = jax.random.split(key, 5)
    N, Cin, H, W = 2, 49, 8, 8
    x = jax.random.normal(kx, (N, Cin, H, W), jnp.float32)
    # ConvTranspose2d parameters (PyTorch layout: weight = (in, out, kH, kW)).
    w1 = 0.05 * jax.random.normal(kw1, (49, 9, 3, 3), jnp.float32)
    b1 = 0.05 * jax.random.normal(kb1, (9,), jnp.float32)
    w2 = 0.05 * jax.random.normal(kw2, (9, 6, 3, 3), jnp.float32)
    b2 = 0.05 * jax.random.normal(kb2, (6,), jnp.float32)

    w1t, b1c, A, b2p = prepare_params(w1, b1, w2, b2)   # once, at "init"

    out = model_forward(x, w1t, b1c, A, b2p)
    jax.block_until_ready(out)

    ref = _ref_forward(x, w1, b1, w2, b2)
    assert out.shape == (N, 9, H, W)
    err = float(jnp.max(jnp.abs(out - ref)))
    assert jnp.allclose(out, ref, atol=2e-3, rtol=2e-3), err
    print("KERNEL_OK")
</pallas_src>

<mosaic_0001>
module attributes {stable_mosaic.version = 11 : i64} {
  func.func @_fused_kernel(%arg0: i32, %arg1: memref<8x441x32xf32, #tpu.memory_space<vmem>>, %arg2: memref<9x441xf32, #tpu.memory_space<vmem>>, %arg3: memref<9x1xf32, #tpu.memory_space<vmem>>, %arg4: memref<16x9x9xf32, #tpu.memory_space<vmem>>, %arg5: memref<9x1xf32, #tpu.memory_space<vmem>>, %arg6: memref<4x9x32xf32, #tpu.memory_space<vmem>>) attributes {dimension_semantics = [#tpu.dimension_semantics<parallel>], iteration_bounds = array<i64: 1>, scalar_prefetch = 0 : i64, scratch_operands = 0 : i64, tpu.core_type = #tpu.core_type<tc>, window_params = [{transform_indices = @transform_0, window_bounds = array<i64: 8, 441, 32>}, {pipeline_mode = #tpu.pipeline_mode<synchronous>, transform_indices = @transform_1, window_bounds = array<i64: 9, 441>}, {pipeline_mode = #tpu.pipeline_mode<synchronous>, transform_indices = @transform_2, window_bounds = array<i64: 9, 1>}, {pipeline_mode = #tpu.pipeline_mode<synchronous>, transform_indices = @transform_3, window_bounds = array<i64: 16, 9, 9>}, {pipeline_mode = #tpu.pipeline_mode<synchronous>, transform_indices = @transform_4, window_bounds = array<i64: 9, 1>}, {transform_indices = @transform_5, window_bounds = array<i64: 4, 9, 32>}]} {
    %c0 = arith.constant 0 : index
    %c0_0 = arith.constant 0 : index
    %0 = vector.load %arg2[%c0, %c0_0] : memref<9x441xf32, #tpu.memory_space<vmem>>, vector<9x441xf32>
    %c0_1 = arith.constant 0 : index
    %c0_2 = arith.constant 0 : index
    %1 = vector.load %arg3[%c0_1, %c0_2] : memref<9x1xf32, #tpu.memory_space<vmem>>, vector<9x1xf32>
    %c0_3 = arith.constant 0 : index
    %c0_4 = arith.constant 0 : index
    %2 = vector.load %arg5[%c0_3, %c0_4] : memref<9x1xf32, #tpu.memory_space<vmem>>, vector<9x1xf32>
    %c0_5 = arith.constant 0 : index
    %c0_6 = arith.constant 0 : index
    %c0_7 = arith.constant 0 : index
    %3 = vector.load %arg1[%c0_5, %c0_6, %c0_7] : memref<8x441x32xf32, #tpu.memory_space<vmem>>, vector<1x441x32xf32>
    %4 = vector.shape_cast %3 : vector<1x441x32xf32> to vector<441x32xf32>
    %cst = arith.constant dense<0.000000e+00> : vector<9x32xf32>
    %5 = tpu.matmul %0, %4, %cst {dimension_numbers = #tpu.dot_dimension_numbers<[1], [0], [0], [1], [0, 0, 1, 1], [], []>} : vector<9x441xf32>, vector<441x32xf32>, vector<9x32xf32> -> vector<9x32xf32>
    %6 = vector.broadcast %1 : vector<9x1xf32> to vector<9x32xf32>
    %7 = arith.addf %5, %6 : vector<9x32xf32>
    %8 = arith.mulf %7, %7 : vector<9x32xf32>
    %cst_8 = arith.constant 0.00558937481 : f32
    %9 = vector.broadcast %cst_8 : f32 to vector<9x32xf32>
    %10 = arith.mulf %7, %9 : vector<9x32xf32>
    %11 = arith.mulf %8, %10 : vector<9x32xf32>
    %c1 = arith.constant 1 : index
    %c0_9 = arith.constant 0 : index
    %c0_10 = arith.constant 0 : index
    %12 = vector.load %arg1[%c1, %c0_9, %c0_10] : memref<8x441x32xf32, #tpu.memory_space<vmem>>, vector<1x441x32xf32>
    %13 = vector.shape_cast %12 : vector<1x441x32xf32> to vector<441x32xf32>
    %cst_11 = arith.constant dense<0.000000e+00> : vector<9x32xf32>
    %14 = tpu.matmul %0, %13, %cst_11 {dimension_numbers = #tpu.dot_dimension_numbers<[1], [0], [0], [1], [0, 0, 1, 1], [], []>} : vector<9x441xf32>, vector<441x32xf32>, vector<9x32xf32> -> vector<9x32xf32>
    %15 = vector.broadcast %1 : vector<9x1xf32> to vector<9x32xf32>
    %16 = arith.addf %14, %15 : vector<9x32xf32>
    %17 = arith.mulf %16, %16 : vector<9x32xf32>
    %cst_12 = arith.constant 0.00558937481 : f32
    %18 = vector.broadcast %cst_12 : f32 to vector<9x32xf32>
    %19 = arith.mulf %16, %18 : vector<9x32xf32>
    %20 = arith.mulf %17, %19 : vector<9x32xf32>
    %c2 = arith.constant 2 : index
    %c0_13 = arith.constant 0 : index
    %c0_14 = arith.constant 0 : index
    %21 = vector.load %arg1[%c2, %c0_13, %c0_14] : memref<8x441x32xf32, #tpu.memory_space<vmem>>, vector<1x441x32xf32>
    %22 = vector.shape_cast %21 : vector<1x441x32xf32> to vector<441x32xf32>
    %cst_15 = arith.constant dense<0.000000e+00> : vector<9x32xf32>
    %23 = tpu.matmul %0, %22, %cst_15 {dimension_numbers = #tpu.dot_dimension_numbers<[1], [0], [0], [1], [0, 0, 1, 1], [], []>} : vector<9x441xf32>, vector<441x32xf32>, vector<9x32xf32> -> vector<9x32xf32>
    %24 = vector.broadcast %1 : vector<9x1xf32> to vector<9x32xf32>
    %25 = arith.addf %23, %24 : vector<9x32xf32>
    %26 = arith.mulf %25, %25 : vector<9x32xf32>
    %cst_16 = arith.constant 0.00558937481 : f32
    %27 = vector.broadcast %cst_16 : f32 to vector<9x32xf32>
    %28 = arith.mulf %25, %27 : vector<9x32xf32>
    %29 = arith.mulf %26, %28 : vector<9x32xf32>
    %c3 = arith.constant 3 : index
    %c0_17 = arith.constant 0 : index
    %c0_18 = arith.constant 0 : index
    %30 = vector.load %arg1[%c3, %c0_17, %c0_18] : memref<8x441x32xf32, #tpu.memory_space<vmem>>, vector<1x441x32xf32>
    %31 = vector.shape_cast %30 : vector<1x441x32xf32> to vector<441x32xf32>
    %cst_19 = arith.constant dense<0.000000e+00> : vector<9x32xf32>
    %32 = tpu.matmul %0, %31, %cst_19 {dimension_numbers = #tpu.dot_dimension_numbers<[1], [0], [0], [1], [0, 0, 1, 1], [], []>} : vector<9x441xf32>, vector<441x32xf32>, vector<9x32xf32> -> vector<9x32xf32>
    %33 = vector.broadcast %1 : vector<9x1xf32> to vector<9x32xf32>
    %34 = arith.addf %32, %33 : vector<9x32xf32>
    %35 = arith.mulf %34, %34 : vector<9x32xf32>
    %cst_20 = arith.constant 0.00558937481 : f32
    %36 = vector.broadcast %cst_20 : f32 to vector<9x32xf32>
    %37 = arith.mulf %34, %36 : vector<9x32xf32>
    %38 = arith.mulf %35, %37 : vector<9x32xf32>
    %c4 = arith.constant 4 : index
    %c0_21 = arith.constant 0 : index
    %c0_22 = arith.constant 0 : index
    %39 = vector.load %arg1[%c4, %c0_21, %c0_22] : memref<8x441x32xf32, #tpu.memory_space<vmem>>, vector<1x441x32xf32>
    %40 = vector.shape_cast %39 : vector<1x441x32xf32> to vector<441x32xf32>
    %cst_23 = arith.constant dense<0.000000e+00> : vector<9x32xf32>
    %41 = tpu.matmul %0, %40, %cst_23 {dimension_numbers = #tpu.dot_dimension_numbers<[1], [0], [0], [1], [0, 0, 1, 1], [], []>} : vector<9x441xf32>, vector<441x32xf32>, vector<9x32xf32> -> vector<9x32xf32>
    %42 = vector.broadcast %1 : vector<9x1xf32> to vector<9x32xf32>
    %43 = arith.addf %41, %42 : vector<9x32xf32>
    %44 = arith.mulf %43, %43 : vector<9x32xf32>
    %cst_24 = arith.constant 0.00558937481 : f32
    %45 = vector.broadcast %cst_24 : f32 to vector<9x32xf32>
    %46 = arith.mulf %43, %45 : vector<9x32xf32>
    %47 = arith.mulf %44, %46 : vector<9x32xf32>
    %c5 = arith.constant 5 : index
    %c0_25 = arith.constant 0 : index
    %c0_26 = arith.constant 0 : index
    %48 = vector.load %arg1[%c5, %c0_25, %c0_26] : memref<8x441x32xf32, #tpu.memory_space<vmem>>, vector<1x441x32xf32>
    %49 = vector.shape_cast %48 : vector<1x441x32xf32> to vector<441x32xf32>
    %cst_27 = arith.constant dense<0.000000e+00> : vector<9x32xf32>
    %50 = tpu.matmul %0, %49, %cst_27 {dimension_numbers = #tpu.dot_dimension_numbers<[1], [0], [0], [1], [0, 0, 1, 1], [], []>} : vector<9x441xf32>, vector<441x32xf32>, vector<9x32xf32> -> vector<9x32xf32>
    %51 = vector.broadcast %1 : vector<9x1xf32> to vector<9x32xf32>
    %52 = arith.addf %50, %51 : vector<9x32xf32>
    %53 = arith.mulf %52, %52 : vector<9x32xf32>
    %cst_28 = arith.constant 0.00558937481 : f32
    %54 = vector.broadcast %cst_28 : f32 to vector<9x32xf32>
    %55 = arith.mulf %52, %54 : vector<9x32xf32>
    %56 = arith.mulf %53, %55 : vector<9x32xf32>
    %c6 = arith.constant 6 : index
    %c0_29 = arith.constant 0 : index
    %c0_30 = arith.constant 0 : index
    %57 = vector.load %arg1[%c6, %c0_29, %c0_30] : memref<8x441x32xf32, #tpu.memory_space<vmem>>, vector<1x441x32xf32>
    %58 = vector.shape_cast %57 : vector<1x441x32xf32> to vector<441x32xf32>
    %cst_31 = arith.constant dense<0.000000e+00> : vector<9x32xf32>
    %59 = tpu.matmul %0, %58, %cst_31 {dimension_numbers = #tpu.dot_dimension_numbers<[1], [0], [0], [1], [0, 0, 1, 1], [], []>} : vector<9x441xf32>, vector<441x32xf32>, vector<9x32xf32> -> vector<9x32xf32>
    %60 = vector.broadcast %1 : vector<9x1xf32> to vector<9x32xf32>
    %61 = arith.addf %59, %60 : vector<9x32xf32>
    %62 = arith.mulf %61, %61 : vector<9x32xf32>
    %cst_32 = arith.constant 0.00558937481 : f32
    %63 = vector.broadcast %cst_32 : f32 to vector<9x32xf32>
    %64 = arith.mulf %61, %63 : vector<9x32xf32>
    %65 = arith.mulf %62, %64 : vector<9x32xf32>
    %c7 = arith.constant 7 : index
    %c0_33 = arith.constant 0 : index
    %c0_34 = arith.constant 0 : index
    %66 = vector.load %arg1[%c7, %c0_33, %c0_34] : memref<8x441x32xf32, #tpu.memory_space<vmem>>, vector<1x441x32xf32>
    %67 = vector.shape_cast %66 : vector<1x441x32xf32> to vector<441x32xf32>
    %cst_35 = arith.constant dense<0.000000e+00> : vector<9x32xf32>
    %68 = tpu.matmul %0, %67, %cst_35 {dimension_numbers = #tpu.dot_dimension_numbers<[1], [0], [0], [1], [0, 0, 1, 1], [], []>} : vector<9x441xf32>, vector<441x32xf32>, vector<9x32xf32> -> vector<9x32xf32>
    %69 = vector.broadcast %1 : vector<9x1xf32> to vector<9x32xf32>
    %70 = arith.addf %68, %69 : vector<9x32xf32>
    %71 = arith.mulf %70, %70 : vector<9x32xf32>
    %cst_36 = arith.constant 0.00558937481 : f32
    %72 = vector.broadcast %cst_36 : f32 to vector<9x32xf32>
    %73 = arith.mulf %70, %72 : vector<9x32xf32>
    %74 = arith.mulf %71, %73 : vector<9x32xf32>
    %c0_37 = arith.constant 0 : index
    %c0_38 = arith.constant 0 : index
    %c0_39 = arith.constant 0 : index
    %75 = vector.load %arg4[%c0_37, %c0_38, %c0_39] : memref<16x9x9xf32, #tpu.memory_space<vmem>>, vector<1x9x9xf32>
    %76 = vector.shape_cast %75 : vector<1x9x9xf32> to vector<9x9xf32>
    %cst_40 = arith.constant dense<0.000000e+00> : vector<9x32xf32>
    %77 = tpu.matmul %76, %47, %cst_40 {dimension_numbers = #tpu.dot_dimension_numbers<[1], [0], [0], [1], [0, 0, 1, 1], [], []>} : vector<9x9xf32>, vector<9x32xf32>, vector<9x32xf32> -> vector<9x32xf32>
    %78 = vector.broadcast %2 : vector<9x1xf32> to vector<9x32xf32>
    %79 = arith.addf %78, %77 : vector<9x32xf32>
    %80 = arith.addf %11, %79 : vector<9x32xf32>
    %cst_41 = arith.constant 0.797884583 : f32
    %81 = vector.broadcast %cst_41 : f32 to vector<9x32xf32>
    %82 = arith.mulf %80, %81 : vector<9x32xf32>
    %83 = math.tanh %82 : vector<9x32xf32>
    %cst_42 = arith.constant 1.000000e+00 : f32
    %84 = vector.broadcast %cst_42 : f32 to vector<9x32xf32>
    %85 = arith.addf %83, %84 : vector<9x32xf32>
    %86 = arith.mulf %85, %85 : vector<9x32xf32>
    %c0_43 = arith.constant 0 : index
    %c0_44 = arith.constant 0 : index
    %c0_45 = arith.constant 0 : index
    %87 = vector.load %arg6[%c0_43, %c0_44, %c0_45] : memref<4x9x32xf32, #tpu.memory_space<vmem>>, vector<1x9x32xf32>
    %88 = vector.shape_cast %87 : vector<1x9x32xf32> to vector<9x32xf32>
    %89 = vector.shape_cast %86 : vector<9x32xf32> to vector<1x9x32xf32>
    tpu.vector_store %arg6[%c0_43, %c0_44, %c0_45], %89 {strides = array<i32>} : memref<4x9x32xf32, #tpu.memory_space<vmem>>, vector<1x9x32xf32>,
    %c4_46 = arith.constant 4 : index
    %c0_47 = arith.constant 0 : index
    %c0_48 = arith.constant 0 : index
    %90 = vector.load %arg4[%c4_46, %c0_47, %c0_48] : memref<16x9x9xf32, #tpu.memory_space<vmem>>, vector<1x9x9xf32>
    %91 = vector.shape_cast %90 : vector<1x9x9xf32> to vector<9x9xf32>
    %cst_49 = arith.constant dense<0.000000e+00> : vector<9x32xf32>
    %92 = tpu.matmul %91, %47, %cst_49 {dimension_numbers = #tpu.dot_dimension_numbers<[1], [0], [0], [1], [0, 0, 1, 1], [], []>} : vector<9x9xf32>, vector<9x32xf32>, vector<9x32xf32> -> vector<9x32xf32>
    %93 = vector.broadcast %2 : vector<9x1xf32> to vector<9x32xf32>
    %94 = arith.addf %93, %92 : vector<9x32xf32>
    %c5_50 = arith.constant 5 : index
    %c0_51 = arith.constant 0 : index
    %c0_52 = arith.constant 0 : index
    %95 = vector.load %arg4[%c5_50, %c0_51, %c0_52] : memref<16x9x9xf32, #tpu.memory_space<vmem>>, vector<1x9x9xf32>
    %96 = vector.shape_cast %95 : vector<1x9x9xf32> to vector<9x9xf32>
    %cst_53 = arith.constant dense<0.000000e+00> : vector<9x32xf32>
    %97 = tpu.matmul %96, %56, %cst_53 {dimension_numbers = #tpu.dot_dimension_numbers<[1], [0], [0], [1], [0, 0, 1, 1], [], []>} : vector<9x9xf32>, vector<9x32xf32>, vector<9x32xf32> -> vector<9x32xf32>
    %98 = arith.addf %94, %97 : vector<9x32xf32>
    %99 = arith.addf %20, %98 : vector<9x32xf32>
    %cst_54 = arith.constant 0.797884583 : f32
    %100 = vector.broadcast %cst_54 : f32 to vector<9x32xf32>
    %101 = arith.mulf %99, %100 : vector<9x32xf32>
    %102 = math.tanh %101 : vector<9x32xf32>
    %cst_55 = arith.constant 1.000000e+00 : f32
    %103 = vector.broadcast %cst_55 : f32 to vector<9x32xf32>
    %104 = arith.addf %102, %103 : vector<9x32xf32>
    %105 = arith.mulf %104, %104 : vector<9x32xf32>
    %c1_56 = arith.constant 1 : index
    %c0_57 = arith.constant 0 : index
    %c0_58 = arith.constant 0 : index
    %106 = vector.load %arg6[%c1_56, %c0_57, %c0_58] : memref<4x9x32xf32, #tpu.memory_space<vmem>>, vector<1x9x32xf32>
    %107 = vector.shape_cast %106 : vector<1x9x32xf32> to vector<9x32xf32>
    %108 = vector.shape_cast %105 : vector<9x32xf32> to vector<1x9x32xf32>
    tpu.vector_store %arg6[%c1_56, %c0_57, %c0_58], %108 {strides = array<i32>} : memref<4x9x32xf32, #tpu.memory_space<vmem>>, vector<1x9x32xf32>,
    %c8 = arith.constant 8 : index
    %c0_59 = arith.constant 0 : index
    %c0_60 = arith.constant 0 : index
    %109 = vector.load %arg4[%c8, %c0_59, %c0_60] : memref<16x9x9xf32, #tpu.memory_space<vmem>>, vector<1x9x9xf32>
    %110 = vector.shape_cast %109 : vector<1x9x9xf32> to vector<9x9xf32>
    %cst_61 = arith.constant dense<0.000000e+00> : vector<9x32xf32>
    %111 = tpu.matmul %110, %47, %cst_61 {dimension_numbers = #tpu.dot_dimension_numbers<[1], [0], [0], [1], [0, 0, 1, 1], [], []>} : vector<9x9xf32>, vector<9x32xf32>, vector<9x32xf32> -> vector<9x32xf32>
    %112 = vector.broadcast %2 : vector<9x1xf32> to vector<9x32xf32>
    %113 = arith.addf %112, %111 : vector<9x32xf32>
    %c10 = arith.constant 10 : index
    %c0_62 = arith.constant 0 : index
    %c0_63 = arith.constant 0 : index
    %114 = vector.load %arg4[%c10, %c0_62, %c0_63] : memref<16x9x9xf32, #tpu.memory_space<vmem>>, vector<1x9x9xf32>
    %115 = vector.shape_cast %114 : vector<1x9x9xf32> to vector<9x9xf32>
    %cst_64 = arith.constant dense<0.000000e+00> : vector<9x32xf32>
    %116 = tpu.matmul %115, %65, %cst_64 {dimension_numbers = #tpu.dot_dimension_numbers<[1], [0], [0], [1], [0, 0, 1, 1], [], []>} : vector<9x9xf32>, vector<9x32xf32>, vector<9x32xf32> -> vector<9x32xf32>
    %117 = arith.addf %113, %116 : vector<9x32xf32>
    %118 = arith.addf %29, %117 : vector<9x32xf32>
    %cst_65 = arith.constant 0.797884583 : f32
    %119 = vector.broadcast %cst_65 : f32 to vector<9x32xf32>
    %120 = arith.mulf %118, %119 : vector<9x32xf32>
    %121 = math.tanh %120 : vector<9x32xf32>
    %cst_66 = arith.constant 1.000000e+00 : f32
    %122 = vector.broadcast %cst_66 : f32 to vector<9x32xf32>
    %123 = arith.addf %121, %122 : vector<9x32xf32>
    %124 = arith.mulf %123, %123 : vector<9x32xf32>
    %c2_67 = arith.constant 2 : index
    %c0_68 = arith.constant 0 : index
    %c0_69 = arith.constant 0 : index
    %125 = vector.load %arg6[%c2_67, %c0_68, %c0_69] : memref<4x9x32xf32, #tpu.memory_space<vmem>>, vector<1x9x32xf32>
    %126 = vector.shape_cast %125 : vector<1x9x32xf32> to vector<9x32xf32>
    %127 = vector.shape_cast %124 : vector<9x32xf32> to vector<1x9x32xf32>
    tpu.vector_store %arg6[%c2_67, %c0_68, %c0_69], %127 {strides = array<i32>} : memref<4x9x32xf32, #tpu.memory_space<vmem>>, vector<1x9x32xf32>,
    %c12 = arith.constant 12 : index
    %c0_70 = arith.constant 0 : index
    %c0_71 = arith.constant 0 : index
    %128 = vector.load %arg4[%c12, %c0_70, %c0_71] : memref<16x9x9xf32, #tpu.memory_space<vmem>>, vector<1x9x9xf32>
    %129 = vector.shape_cast %128 : vector<1x9x9xf32> to vector<9x9xf32>
    %cst_72 = arith.constant dense<0.000000e+00> : vector<9x32xf32>
    %130 = tpu.matmul %129, %47, %cst_72 {dimension_numbers = #tpu.dot_dimension_numbers<[1], [0], [0], [1], [0, 0, 1, 1], [], []>} : vector<9x9xf32>, vector<9x32xf32>, vector<9x32xf32> -> vector<9x32xf32>
    %131 = vector.broadcast %2 : vector<9x1xf32> to vector<9x32xf32>
    %132 = arith.addf %131, %130 : vector<9x32xf32>
    %c13 = arith.constant 13 : index
    %c0_73 = arith.constant 0 : index
    %c0_74 = arith.constant 0 : index
    %133 = vector.load %arg4[%c13, %c0_73, %c0_74] : memref<16x9x9xf32, #tpu.memory_space<vmem>>, vector<1x9x9xf32>
    %134 = vector.shape_cast %133 : vector<1x9x9xf32> to vector<9x9xf32>
    %cst_75 = arith.constant dense<0.000000e+00> : vector<9x32xf32>
    %135 = tpu.matmul %134, %56, %cst_75 {dimension_numbers = #tpu.dot_dimension_numbers<[1], [0], [0], [1], [0, 0, 1, 1], [], []>} : vector<9x9xf32>, vector<9x32xf32>, vector<9x32xf32> -> vector<9x32xf32>
    %136 = arith.addf %132, %135 : vector<9x32xf32>
    %c14 = arith.constant 14 : index
    %c0_76 = arith.constant 0 : index
    %c0_77 = arith.constant 0 : index
    %137 = vector.load %arg4[%c14, %c0_76, %c0_77] : memref<16x9x9xf32, #tpu.memory_space<vmem>>, vector<1x9x9xf32>
    %138 = vector.shape_cast %137 : vector<1x9x9xf32> to vector<9x9xf32>
    %cst_78 = arith.constant dense<0.000000e+00> : vector<9x32xf32>
    %139 = tpu.matmul %138, %65, %cst_78 {dimension_numbers = #tpu.dot_dimension_numbers<[1], [0], [0], [1], [0, 0, 1, 1], [], []>} : vector<9x9xf32>, vector<9x32xf32>, vector<9x32xf32> -> vector<9x32xf32>
    %140 = arith.addf %136, %139 : vector<9x32xf32>
    %c15 = arith.constant 15 : index
    %c0_79 = arith.constant 0 : index
    %c0_80 = arith.constant 0 : index
    %141 = vector.load %arg4[%c15, %c0_79, %c0_80] : memref<16x9x9xf32, #tpu.memory_space<vmem>>, vector<1x9x9xf32>
    %142 = vector.shape_cast %141 : vector<1x9x9xf32> to vector<9x9xf32>
    %cst_81 = arith.constant dense<0.000000e+00> : vector<9x32xf32>
    %143 = tpu.matmul %142, %74, %cst_81 {dimension_numbers = #tpu.dot_dimension_numbers<[1], [0], [0], [1], [0, 0, 1, 1], [], []>} : vector<9x9xf32>, vector<9x32xf32>, vector<9x32xf32> -> vector<9x32xf32>
    %144 = arith.addf %140, %143 : vector<9x32xf32>
    %145 = arith.addf %38, %144 : vector<9x32xf32>
    %cst_82 = arith.constant 0.797884583 : f32
    %146 = vector.broadcast %cst_82 : f32 to vector<9x32xf32>
    %147 = arith.mulf %145, %146 : vector<9x32xf32>
    %148 = math.tanh %147 : vector<9x32xf32>
    %cst_83 = arith.constant 1.000000e+00 : f32
    %149 = vector.broadcast %cst_83 : f32 to vector<9x32xf32>
    %150 = arith.addf %148, %149 : vector<9x32xf32>
    %151 = arith.mulf %150, %150 : vector<9x32xf32>
    %c3_84 = arith.constant 3 : index
    %c0_85 = arith.constant 0 : index
    %c0_86 = arith.constant 0 : index
    %152 = vector.load %arg6[%c3_84, %c0_85, %c0_86] : memref<4x9x32xf32, #tpu.memory_space<vmem>>, vector<1x9x32xf32>
    %153 = vector.shape_cast %152 : vector<1x9x32xf32> to vector<9x32xf32>
    %154 = vector.shape_cast %151 : vector<9x32xf32> to vector<1x9x32xf32>
    tpu.vector_store %arg6[%c3_84, %c0_85, %c0_86], %154 {strides = array<i32>} : memref<4x9x32xf32, #tpu.memory_space<vmem>>, vector<1x9x32xf32>,
    return
  }
  func.func @transform_0(%arg0: i32) -> (i32, i32, i32) {
    %c0_i32 = arith.constant 0 : i32
    %c0_i32_0 = arith.constant 0 : i32
    %c0_i32_1 = arith.constant 0 : i32
    return %c0_i32, %c0_i32_0, %arg0 : i32, i32, i32
  }
  func.func @transform_1(%arg0: i32) -> (i32, i32) {
    %c0_i32 = arith.constant 0 : i32
    %c0_i32_0 = arith.constant 0 : i32
    %c0_i32_1 = arith.constant 0 : i32
    return %c0_i32, %c0_i32_0 : i32, i32
  }
  func.func @transform_2(%arg0: i32) -> (i32, i32) {
    %c0_i32 = arith.constant 0 : i32
    %c0_i32_0 = arith.constant 0 : i32
    %c0_i32_1 = arith.constant 0 : i32
    return %c0_i32, %c0_i32_0 : i32, i32
  }
  func.func @transform_3(%arg0: i32) -> (i32, i32, i32) {
    %c0_i32 = arith.constant 0 : i32
    %c0_i32_0 = arith.constant 0 : i32
    %c0_i32_1 = arith.constant 0 : i32
    %c0_i32_2 = arith.constant 0 : i32
    return %c0_i32, %c0_i32_0, %c0_i32_1 : i32, i32, i32
  }
  func.func @transform_4(%arg0: i32) -> (i32, i32) {
    %c0_i32 = arith.constant 0 : i32
    %c0_i32_0 = arith.constant 0 : i32
    %c0_i32_1 = arith.constant 0 : i32
    return %c0_i32, %c0_i32_0 : i32, i32
  }
  func.func @transform_5(%arg0: i32) -> (i32, i32, i32) {
    %c0_i32 = arith.constant 0 : i32
    %c0_i32_0 = arith.constant 0 : i32
    %c0_i32_1 = arith.constant 0 : i32
    return %c0_i32, %c0_i32_0, %arg0 : i32, i32, i32
  }
}

</mosaic_0001>

<llo_original>
// kernel: model_forward.1
$region0: #{model_forward.1}
  #allocation0 [shape = 'u32[]', space=smem, size = 0x4, offset = 0x4, fixed_abs, tag = 'smem constant byte address 0x4 - core index']
  #allocation1 [shape = 'u32[72,128]{1,0:T(1,128)}', space=vmem, size = 0x9000, scoped, tag = 'internal scratch']
  %s0 = inlined_call_operand.vmem [shape: f32[8,441,32], index: 0, kind: input, shape index: {}]
  %s1 = inlined_call_operand.vmem [shape: f32[9,441], index: 1, kind: input, shape index: {}]
  %s2 = inlined_call_operand.vmem [shape: f32[9,1], index: 2, kind: input, shape index: {}]
  %s3 = inlined_call_operand.vmem [shape: f32[16,9,9], index: 3, kind: input, shape index: {}]
  %s4 = inlined_call_operand.vmem [shape: f32[9,1], index: 4, kind: input, shape index: {}]
  %s5 = inlined_call_operand.vmem [shape: f32[4,9,32], index: 5, kind: output, shape index: {}]
  %s6 = sld [smem:[#allocation0]]
  $region30: #{model_forward.1} parent=0
    _
  %s8 = ssub.s32 1, %s6
  %s9 = scalar_select 0, %s8, %s6
  // Predicated region
  $region2: #{model_forward.1} parent=0 // pred_check
    _
  $region3: #{model_forward.1} parent=0 // pred_check_branch
    %11 = sbr.rel (0) target = $region5
  $region4: #{model_forward.1} parent=0 // pred_region
    _
  $region5: #{model_forward.1} parent=0 // pred_fallthru
    _
  // Predicated region
  $region6: #{model_forward.1} parent=0 // pred_check
    _
  $region7: #{model_forward.1} parent=0 // pred_check_branch
    %13 = sbr.rel (0) target = $region9
  $region8: #{model_forward.1} parent=0 // pred_region
    _
  $region9: #{model_forward.1} parent=0 // pred_fallthru
    _
  // Predicated region
  $region10: #{model_forward.1} parent=0 // pred_check
    _
  $region11: #{model_forward.1} parent=0 // pred_check_branch
    %15 = sbr.rel (0) target = $region13
  $region12: #{model_forward.1} parent=0 // pred_region
    _
  $region13: #{model_forward.1} parent=0 // pred_fallthru
    _
  // Predicated region
  $region14: #{model_forward.1} parent=0 // pred_check
    _
  $region15: #{model_forward.1} parent=0 // pred_check_branch
    %17 = sbr.rel (0) target = $region17
  $region16: #{model_forward.1} parent=0 // pred_region
    _
  $region17: #{model_forward.1} parent=0 // pred_fallthru
    _
  // Predicated region
  $region18: #{model_forward.1} parent=0 // pred_check
    _
  $region19: #{model_forward.1} parent=0 // pred_check_branch
    %19 = sbr.rel (0) target = $region21
  $region20: #{model_forward.1} parent=0 // pred_region
    _
  $region21: #{model_forward.1} parent=0 // pred_fallthru
    _
  %v20 = vld [vmem:[%s1] sm:$0xff]
  %v21 = vld [vmem:[%s1 + $0x8] sm:$0xff]
  %v22 = vld [vmem:[%s1 + $0x10] sm:$0xff]
  %v23 = vld [vmem:[%s1 + $0x18] sm:$0xff]
  %v24 = vld [vmem:[%s1 + $0x20] sm:$0x1]
  %v25 = vld [vmem:[%s1 + $0x28] sm:$0x1]
  %v26 = vld [vmem:[%s1 + $0x30] sm:$0x1]
  %v27 = vld [vmem:[%s1 + $0x38] sm:$0x1]
  %v28 = vld [vmem:[%s2] sm:$0xff]
  %v29 = vld [vmem:[%s2 + $0x8] sm:$0x1]
  %v30 = vld [vmem:[%s4] sm:$0xff]
  %v31 = vld [vmem:[%s4 + $0x8] sm:$0x1]
  %v32 = vld [vmem:[%s0] sm:$0xff]
  %v33 = vld [vmem:[%s0 + $0x8] sm:$0xff]
  %v34 = vld [vmem:[%s0 + $0x10] sm:$0xff]
  %v35 = vld [vmem:[%s0 + $0x18] sm:$0xff]
  %v36 = vld [vmem:[%s0 + $0x20] sm:$0xff]
  %v37 = vld [vmem:[%s0 + $0x28] sm:$0xff]
  %v38 = vld [vmem:[%s0 + $0x30] sm:$0xff]
  %v39 = vld [vmem:[%s0 + $0x38] sm:$0xff]
  %v40 = vld [vmem:[%s0 + $0x40] sm:$0xff]
  %v41 = vld [vmem:[%s0 + $0x48] sm:$0xff]
  %v42 = vld [vmem:[%s0 + $0x50] sm:$0xff]
  %v43 = vld [vmem:[%s0 + $0x58] sm:$0xff]
  %v44 = vld [vmem:[%s0 + $0x60] sm:$0xff]
  %v45 = vld [vmem:[%s0 + $0x68] sm:$0xff]
  %v46 = vld [vmem:[%s0 + $0x70] sm:$0xff]
  %v47 = vld [vmem:[%s0 + $0x78] sm:$0xff]
  %v48 = vld [vmem:[%s0 + $0x80] sm:$0xff]
  %v49 = vld [vmem:[%s0 + $0x88] sm:$0xff]
  %v50 = vld [vmem:[%s0 + $0x90] sm:$0xff]
  %v51 = vld [vmem:[%s0 + $0x98] sm:$0xff]
  %v52 = vld [vmem:[%s0 + $0xa0] sm:$0xff]
  %v53 = vld [vmem:[%s0 + $0xa8] sm:$0xff]
  %v54 = vld [vmem:[%s0 + $0xb0] sm:$0xff]
  %v55 = vld [vmem:[%s0 + $0xb8] sm:$0xff]
  %v56 = vld [vmem:[%s0 + $0xc0] sm:$0xff]
  %v57 = vld [vmem:[%s0 + $0xc8] sm:$0xff]
  %v58 = vld [vmem:[%s0 + $0xd0] sm:$0xff]
  %v59 = vld [vmem:[%s0 + $0xd8] sm:$0xff]
  %v60 = vld [vmem:[%s0 + $0xe0] sm:$0xff]
  %v61 = vld [vmem:[%s0 + $0xe8] sm:$0xff]
  %v62 = vld [vmem:[%s0 + $0xf0] sm:$0xff]
  %v63 = vld [vmem:[%s0 + $0xf8] sm:$0xff]
  %v64 = vld [vmem:[%s0 + $0x100] sm:$0xff]
  %v65 = vld [vmem:[%s0 + $0x108] sm:$0xff]
  %v66 = vld [vmem:[%s0 + $0x110] sm:$0xff]
  %v67 = vld [vmem:[%s0 + $0x118] sm:$0xff]
  %v68 = vld [vmem:[%s0 + $0x120] sm:$0xff]
  %v69 = vld [vmem:[%s0 + $0x128] sm:$0xff]
  %v70 = vld [vmem:[%s0 + $0x130] sm:$0xff]
  %v71 = vld [vmem:[%s0 + $0x138] sm:$0xff]
  %v72 = vld [vmem:[%s0 + $0x140] sm:$0xff]
  %v73 = vld [vmem:[%s0 + $0x148] sm:$0xff]
  %v74 = vld [vmem:[%s0 + $0x150] sm:$0xff]
  %v75 = vld [vmem:[%s0 + $0x158] sm:$0xff]
  %v76 = vld [vmem:[%s0 + $0x160] sm:$0xff]
  %v77 = vld [vmem:[%s0 + $0x168] sm:$0xff]
  %v78 = vld [vmem:[%s0 + $0x170] sm:$0xff]
  %v79 = vld [vmem:[%s0 + $0x178] sm:$0xff]
  %v80 = vld [vmem:[%s0 + $0x180] sm:$0xff]
  %v81 = vld [vmem:[%s0 + $0x188] sm:$0xff]
  %v82 = vld [vmem:[%s0 + $0x190] sm:$0xff]
  %v83 = vld [vmem:[%s0 + $0x198] sm:$0xff]
  %v84 = vld [vmem:[%s0 + $0x1a0] sm:$0xff]
  %v85 = vld [vmem:[%s0 + $0x1a8] sm:$0xff]
  %v86 = vld [vmem:[%s0 + $0x1b0] sm:$0xff]
  %v87 = vld [vmem:[%s0 + $0x1b8] sm:$0x1]
  %89 = vset.pattern.permute.xlu0 0
  %90 = vperm.xlu0 %89, %v28
  %v91 = vpop.permute.xlu0 %90
  %94 = vset.pattern.permute.xlu0 0
  %95 = vperm.xlu0 %94, %v29
  %v96 = vpop.permute.xlu0 %95
  %vm98 = vcmask 465920
  %v100 = vsel %vm98, %v23, 0
  %v103 = vsel %vm98, %v27, 0
  %vm105 = vcmask 1040384
  %v107 = vsel %vm105, %v87, 0
  %109 = vmatpush.msra.mxu0 %v47
  %110 = vmatpush.msra.mxu0 %v46
  %111 = vmatpush.msra.mxu0 %v45
  %112 = vmatpush.msra.mxu0 %v44
  %113 = vmatpush.msra.mxu0 %v43
  %114 = vmatpush.msra.mxu0 %v42
  %115 = vmatpush.msra.mxu0 %v41
  %116 = vmatpush.msra.mxu0 %v40
  %117 = vmatpush.msra.mxu0 %v39
  %118 = vmatpush.msra.mxu0 %v38
  %119 = vmatpush.msra.mxu0 %v37
  %120 = vmatpush.msra.mxu0 %v36
  %121 = vmatpush.msra.mxu0 %v35
  %122 = vmatpush.msra.mxu0 %v34
  %123 = vmatpush.msra.mxu0 %v33
  %124 = vmatpush.msra.mxu0 %v32
  %125 = vmatmul.f32.gmra.mxu0 %v20
  %v126 = vpop.f32.mrf.mxu0
  %v127 = vadd.f32 %v91, %v126
  %128 = vmatmul.f32.gmra.mxu0 %v24
  %v129 = vpop.f32.mrf.mxu0
  %v130 = vadd.f32 %v96, %v129
  %131 = vdwg.mxu0
  %132 = vmatpush.msra.mxu0 %v63
  %133 = vmatpush.msra.mxu0 %v62
  %134 = vmatpush.msra.mxu0 %v61
  %135 = vmatpush.msra.mxu0 %v60
  %136 = vmatpush.msra.mxu0 %v59
  %137 = vmatpush.msra.mxu0 %v58
  %138 = vmatpush.msra.mxu0 %v57
  %139 = vmatpush.msra.mxu0 %v56
  %140 = vmatpush.msra.mxu0 %v55
  %141 = vmatpush.msra.mxu0 %v54
  %142 = vmatpush.msra.mxu0 %v53
  %143 = vmatpush.msra.mxu0 %v52
  %144 = vmatpush.msra.mxu0 %v51
  %145 = vmatpush.msra.mxu0 %v50
  %146 = vmatpush.msra.mxu0 %v49
  %147 = vmatpush.msra.mxu0 %v48
  %148 = vmatmul.f32.gmra.mxu0 %v21
  %v149 = vpop.f32.mrf.mxu0
  %v150 = vadd.f32 %v127, %v149
  %151 = vmatmul.f32.gmra.mxu0 %v25
  %v152 = vpop.f32.mrf.mxu0
  %v153 = vadd.f32 %v130, %v152
  %154 = vdwg.mxu0
  %155 = vmatpush.msra.mxu0 %v79
  %156 = vmatpush.msra.mxu0 %v78
  %157 = vmatpush.msra.mxu0 %v77
  %158 = vmatpush.msra.mxu0 %v76
  %159 = vmatpush.msra.mxu0 %v75
  %160 = vmatpush.msra.mxu0 %v74
  %161 = vmatpush.msra.mxu0 %v73
  %162 = vmatpush.msra.mxu0 %v72
  %163 = vmatpush.msra.mxu0 %v71
  %164 = vmatpush.msra.mxu0 %v70
  %165 = vmatpush.msra.mxu0 %v69
  %166 = vmatpush.msra.mxu0 %v68
  %167 = vmatpush.msra.mxu0 %v67
  %168 = vmatpush.msra.mxu0 %v66
  %169 = vmatpush.msra.mxu0 %v65
  %170 = vmatpush.msra.mxu0 %v64
  %171 = vmatmul.f32.gmra.mxu0 %v22
  %v172 = vpop.f32.mrf.mxu0
  %v173 = vadd.f32 %v150, %v172
  %174 = vmatmul.f32.gmra.mxu0 %v26
  %v175 = vpop.f32.mrf.mxu0
  %v176 = vadd.f32 %v153, %v175
  %177 = vdwg.mxu0
  %178 = vmatpush.msra.mxu0 0.0
  %179 = vmatpush.msra.mxu0 0.0
  %180 = vmatpush.msra.mxu0 0.0
  %181 = vmatpush.msra.mxu0 0.0
  %182 = vmatpush.msra.mxu0 0.0
  %183 = vmatpush.msra.mxu0 0.0
  %184 = vmatpush.msra.mxu0 0.0
  %185 = vmatpush.msra.mxu0 0.0
  %186 = vmatpush.msra.mxu0 %v107
  %187 = vmatpush.msra.mxu0 %v86
  %188 = vmatpush.msra.mxu0 %v85
  %189 = vmatpush.msra.mxu0 %v84
  %190 = vmatpush.msra.mxu0 %v83
  %191 = vmatpush.msra.mxu0 %v82
  %192 = vmatpush.msra.mxu0 %v81
  %193 = vmatpush.msra.mxu0 %v80
  %194 = vmatmul.f32.gmra.mxu0 %v100
  %v195 = vpop.f32.mrf.mxu0
  %v196 = vadd.f32 %v173, %v195
  %197 = vmatmul.f32.gmra.mxu0 %v103
  %v198 = vpop.f32.mrf.mxu0
  %v199 = vadd.f32 %v176, %v198
  %200 = vdwg.mxu0
  %v201 = vmul.f32 %v196, %v196
  %v202 = vmul.f32 %v199, %v199
  %v203 = vmul.f32 %v196, 0.005589375
  %v204 = vmul.f32 %v199, 0.005589375
  %v205 = vmul.f32 %v201, %v203
  %v206 = vmul.f32 %v202, %v204
  %s207 = scalar_lea.vmem %s0, 448
  %v208 = vld [vmem:[%s207] sm:$0xff]
  %v209 = vld [vmem:[%s207 + $0x8] sm:$0xff]
  %v210 = vld [vmem:[%s207 + $0x10] sm:$0xff]
  %v211 = vld [vmem:[%s207 + $0x18] sm:$0xff]
  %v212 = vld [vmem:[%s207 + $0x20] sm:$0xff]
  %v213 = vld [vmem:[%s207 + $0x28] sm:$0xff]
  %v214 = vld [vmem:[%s207 + $0x30] sm:$0xff]
  %v215 = vld [vmem:[%s207 + $0x38] sm:$0xff]
  %v216 = vld [vmem:[%s207 + $0x40] sm:$0xff]
  %v217 = vld [vmem:[%s207 + $0x48] sm:$0xff]
  %v218 = vld [vmem:[%s207 + $0x50] sm:$0xff]
  %v219 = vld [vmem:[%s207 + $0x58] sm:$0xff]
  %v220 = vld [vmem:[%s207 + $0x60] sm:$0xff]
  %v221 = vld [vmem:[%s207 + $0x68] sm:$0xff]
  %v222 = vld [vmem:[%s207 + $0x70] sm:$0xff]
  %v223 = vld [vmem:[%s207 + $0x78] sm:$0xff]
  %v224 = vld [vmem:[%s207 + $0x80] sm:$0xff]
  %v225 = vld [vmem:[%s207 + $0x88] sm:$0xff]
  %v226 = vld [vmem:[%s207 + $0x90] sm:$0xff]
  %v227 = vld [vmem:[%s207 + $0x98] sm:$0xff]
  %v228 = vld [vmem:[%s207 + $0xa0] sm:$0xff]
  %v229 = vld [vmem:[%s207 + $0xa8] sm:$0xff]
  %v230 = vld [vmem:[%s207 + $0xb0] sm:$0xff]
  %v231 = vld [vmem:[%s207 + $0xb8] sm:$0xff]
  %v232 = vld [vmem:[%s207 + $0xc0] sm:$0xff]
  %v233 = vld [vmem:[%s207 + $0xc8] sm:$0xff]
  %v234 = vld [vmem:[%s207 + $0xd0] sm:$0xff]
  %v235 = vld [vmem:[%s207 + $0xd8] sm:$0xff]
  %v236 = vld [vmem:[%s207 + $0xe0] sm:$0xff]
  %v237 = vld [vmem:[%s207 + $0xe8] sm:$0xff]
  %v238 = vld [vmem:[%s207 + $0xf0] sm:$0xff]
  %v239 = vld [vmem:[%s207 + $0xf8] sm:$0xff]
  %v240 = vld [vmem:[%s207 + $0x100] sm:$0xff]
  %v241 = vld [vmem:[%s207 + $0x108] sm:$0xff]
  %v242 = vld [vmem:[%s207 + $0x110] sm:$0xff]
  %v243 = vld [vmem:[%s207 + $0x118] sm:$0xff]
  %v244 = vld [vmem:[%s207 + $0x120] sm:$0xff]
  %v245 = vld [vmem:[%s207 + $0x128] sm:$0xff]
  %v246 = vld [vmem:[%s207 + $0x130] sm:$0xff]
  %v247 = vld [vmem:[%s207 + $0x138] sm:$0xff]
  %v248 = vld [vmem:[%s207 + $0x140] sm:$0xff]
  %v249 = vld [vmem:[%s207 + $0x148] sm:$0xff]
  %v250 = vld [vmem:[%s207 + $0x150] sm:$0xff]
  %v251 = vld [vmem:[%s207 + $0x158] sm:$0xff]
  %v252 = vld [vmem:[%s207 + $0x160] sm:$0xff]
  %v253 = vld [vmem:[%s207 + $0x168] sm:$0xff]
  %v254 = vld [vmem:[%s207 + $0x170] sm:$0xff]
  %v255 = vld [vmem:[%s207 + $0x178] sm:$0xff]
  %v256 = vld [vmem:[%s207 + $0x180] sm:$0xff]
  %v257 = vld [vmem:[%s207 + $0x188] sm:$0xff]
  %v258 = vld [vmem:[%s207 + $0x190] sm:$0xff]
  %v259 = vld [vmem:[%s207 + $0x198] sm:$0xff]
  %v260 = vld [vmem:[%s207 + $0x1a0] sm:$0xff]
  %v261 = vld [vmem:[%s207 + $0x1a8] sm:$0xff]
  %v262 = vld [vmem:[%s207 + $0x1b0] sm:$0xff]
  %v263 = vld [vmem:[%s207 + $0x1b8] sm:$0x1]
  %v265 = vsel %vm105, %v263, 0
  %267 = vmatpush.msra.mxu0 %v223
  %268 = vmatpush.msra.mxu0 %v222
  %269 = vmatpush.msra.mxu0 %v221
  %270 = vmatpush.msra.mxu0 %v220
  %271 = vmatpush.msra.mxu0 %v219
  %272 = vmatpush.msra.mxu0 %v218
  %273 = vmatpush.msra.mxu0 %v217
  %274 = vmatpush.msra.mxu0 %v216
  %275 = vmatpush.msra.mxu0 %v215
  %276 = vmatpush.msra.mxu0 %v214
  %277 = vmatpush.msra.mxu0 %v213
  %278 = vmatpush.msra.mxu0 %v212
  %279 = vmatpush.msra.mxu0 %v211
  %280 = vmatpush.msra.mxu0 %v210
  %281 = vmatpush.msra.mxu0 %v209
  %282 = vmatpush.msra.mxu0 %v208
  %283 = vmatmul.f32.gmra.mxu0 %v20
  %v284 = vpop.f32.mrf.mxu0
  %v285 = vadd.f32 %v91, %v284
  %286 = vmatmul.f32.gmra.mxu0 %v24
  %v287 = vpop.f32.mrf.mxu0
  %v288 = vadd.f32 %v96, %v287
  %289 = vdwg.mxu0
  %290 = vmatpush.msra.mxu0 %v239
  %291 = vmatpush.msra.mxu0 %v238
  %292 = vmatpush.msra.mxu0 %v237
  %293 = vmatpush.msra.mxu0 %v236
  %294 = vmatpush.msra.mxu0 %v235
  %295 = vmatpush.msra.mxu0 %v234
  %296 = vmatpush.msra.mxu0 %v233
  %297 = vmatpush.msra.mxu0 %v232
  %298 = vmatpush.msra.mxu0 %v231
  %299 = vmatpush.msra.mxu0 %v230
  %300 = vmatpush.msra.mxu0 %v229
  %301 = vmatpush.msra.mxu0 %v228
  %302 = vmatpush.msra.mxu0 %v227
  %303 = vmatpush.msra.mxu0 %v226
  %304 = vmatpush.msra.mxu0 %v225
  %305 = vmatpush.msra.mxu0 %v224
  %306 = vmatmul.f32.gmra.mxu0 %v21
  %v307 = vpop.f32.mrf.mxu0
  %v308 = vadd.f32 %v285, %v307
  %309 = vmatmul.f32.gmra.mxu0 %v25
  %v310 = vpop.f32.mrf.mxu0
  %v311 = vadd.f32 %v288, %v310
  %312 = vdwg.mxu0
  %313 = vmatpush.msra.mxu0 %v255
  %314 = vmatpush.msra.mxu0 %v254
  %315 = vmatpush.msra.mxu0 %v253
  %316 = vmatpush.msra.mxu0 %v252
  %317 = vmatpush.msra.mxu0 %v251
  %318 = vmatpush.msra.mxu0 %v250
  %319 = vmatpush.msra.mxu0 %v249
  %320 = vmatpush.msra.mxu0 %v248
  %321 = vmatpush.msra.mxu0 %v247
  %322 = vmatpush.msra.mxu0 %v246
  %323 = vmatpush.msra.mxu0 %v245
  %324 = vmatpush.msra.mxu0 %v244
  %325 = vmatpush.msra.mxu0 %v243
  %326 = vmatpush.msra.mxu0 %v242
  %327 = vmatpush.msra.mxu0 %v241
  %328 = vmatpush.msra.mxu0 %v240
  %329 = vmatmul.f32.gmra.mxu0 %v22
  %v330 = vpop.f32.mrf.mxu0
  %v331 = vadd.f32 %v308, %v330
  %332 = vmatmul.f32.gmra.mxu0 %v26
  %v333 = vpop.f32.mrf.mxu0
  %v334 = vadd.f32 %v311, %v333
  %335 = vdwg.mxu0
  %336 = vmatpush.msra.mxu0 0.0
  %337 = vmatpush.msra.mxu0 0.0
  %338 = vmatpush.msra.mxu0 0.0
  %339 = vmatpush.msra.mxu0 0.0
  %340 = vmatpush.msra.mxu0 0.0
  %341 = vmatpush.msra.mxu0 0.0
  %342 = vmatpush.msra.mxu0 0.0
  %343 = vmatpush.msra.mxu0 0.0
  %344 = vmatpush.msra.mxu0 %v265
  %345 = vmatpush.msra.mxu0 %v262
  %346 = vmatpush.msra.mxu0 %v261
  %347 = vmatpush.msra.mxu0 %v260
  %348 = vmatpush.msra.mxu0 %v259
  %349 = vmatpush.msra.mxu0 %v258
  %350 = vmatpush.msra.mxu0 %v257
  %351 = vmatpush.msra.mxu0 %v256
  %352 = vmatmul.f32.gmra.mxu0 %v100
  %v353 = vpop.f32.mrf.mxu0
  %v354 = vadd.f32 %v331, %v353
  %355 = vmatmul.f32.gmra.mxu0 %v103
  %v356 = vpop.f32.mrf.mxu0
  %v357 = vadd.f32 %v334, %v356
  %358 = vdwg.mxu0
  %v359 = vmul.f32 %v354, %v354
  %v360 = vmul.f32 %v357, %v357
  %v361 = vmul.f32 %v354, 0.005589375
  %v362 = vmul.f32 %v357, 0.005589375
  %v363 = vmul.f32 %v359, %v361
  %v364 = vmul.f32 %v360, %v362
  %s365 = scalar_lea.vmem %s0, 896
  %v366 = vld [vmem:[%s365] sm:$0xff]
  %v367 = vld [vmem:[%s365 + $0x8] sm:$0xff]
  %v368 = vld [vmem:[%s365 + $0x10] sm:$0xff]
  %v369 = vld [vmem:[%s365 + $0x18] sm:$0xff]
  %v370 = vld [vmem:[%s365 + $0x20] sm:$0xff]
  %v371 = vld [vmem:[%s365 + $0x28] sm:$0xff]
  %v372 = vld [vmem:[%s365 + $0x30] sm:$0xff]
  %v373 = vld [vmem:[%s365 + $0x38] sm:$0xff]
  %v374 = vld [vmem:[%s365 + $0x40] sm:$0xff]
  %v375 = vld [vmem:[%s365 + $0x48] sm:$0xff]
  %v376 = vld [vmem:[%s365 + $0x50] sm:$0xff]
  %v377 = vld [vmem:[%s365 + $0x58] sm:$0xff]
  %v378 = vld [vmem:[%s365 + $0x60] sm:$0xff]
  %v379 = vld [vmem:[%s365 + $0x68] sm:$0xff]
  %v380 = vld [vmem:[%s365 + $0x70] sm:$0xff]
  %v381 = vld [vmem:[%s365 + $0x78] sm:$0xff]
  %v382 = vld [vmem:[%s365 + $0x80] sm:$0xff]
  %v383 = vld [vmem:[%s365 + $0x88] sm:$0xff]
  %v384 = vld [vmem:[%s365 + $0x90] sm:$0xff]
  %v385 = vld [vmem:[%s365 + $0x98] sm:$0xff]
  %v386 = vld [vmem:[%s365 + $0xa0] sm:$0xff]
  %v387 = vld [vmem:[%s365 + $0xa8] sm:$0xff]
  %v388 = vld [vmem:[%s365 + $0xb0] sm:$0xff]
  %v389 = vld [vmem:[%s365 + $0xb8] sm:$0xff]
  %v390 = vld [vmem:[%s365 + $0xc0] sm:$0xff]
  %v391 = vld [vmem:[%s365 + $0xc8] sm:$0xff]
  %v392 = vld [vmem:[%s365 + $0xd0] sm:$0xff]
  %v393 = vld [vmem:[%s365 + $0xd8] sm:$0xff]
  %v394 = vld [vmem:[%s365 + $0xe0] sm:$0xff]
  %v395 = vld [vmem:[%s365 + $0xe8] sm:$0xff]
  %v396 = vld [vmem:[%s365 + $0xf0] sm:$0xff]
  %v397 = vld [vmem:[%s365 + $0xf8] sm:$0xff]
  %v398 = vld [vmem:[%s365 + $0x100] sm:$0xff]
  %v399 = vld [vmem:[%s365 + $0x108] sm:$0xff]
  %v400 = vld [vmem:[%s365 + $0x110] sm:$0xff]
  %v401 = vld [vmem:[%s365 + $0x118] sm:$0xff]
  %v402 = vld [vmem:[%s365 + $0x120] sm:$0xff]
  %v403 = vld [vmem:[%s365 + $0x128] sm:$0xff]
  %v404 = vld [vmem:[%s365 + $0x130] sm:$0xff]
  %v405 = vld [vmem:[%s365 + $0x138] sm:$0xff]
  %v406 = vld [vmem:[%s365 + $0x140] sm:$0xff]
  %v407 = vld [vmem:[%s365 + $0x148] sm:$0xff]
  %v408 = vld [vmem:[%s365 + $0x150] sm:$0xff]
  %v409 = vld [vmem:[%s365 + $0x158] sm:$0xff]
  %v410 = vld [vmem:[%s365 + $0x160] sm:$0xff]
  %v411 = vld [vmem:[%s365 + $0x168] sm:$0xff]
  %v412 = vld [vmem:[%s365 + $0x170] sm:$0xff]
  %v413 = vld [vmem:[%s365 + $0x178] sm:$0xff]
  %v414 = vld [vmem:[%s365 + $0x180] sm:$0xff]
  %v415 = vld [vmem:[%s365 + $0x188] sm:$0xff]
  %v416 = vld [vmem:[%s365 + $0x190] sm:$0xff]
  %v417 = vld [vmem:[%s365 + $0x198] sm:$0xff]
  %v418 = vld [vmem:[%s365 + $0x1a0] sm:$0xff]
  %v419 = vld [vmem:[%s365 + $0x1a8] sm:$0xff]
  %v420 = vld [vmem:[%s365 + $0x1b0] sm:$0xff]
  %v421 = vld [vmem:[%s365 + $0x1b8] sm:$0x1]
  %v423 = vsel %vm105, %v421, 0
  %425 = vmatpush.msra.mxu0 %v381
  %426 = vmatpush.msra.mxu0 %v380
  %427 = vmatpush.msra.mxu0 %v379
  %428 = vmatpush.msra.mxu0 %v378
  %429 = vmatpush.msra.mxu0 %v377
  %430 = vmatpush.msra.mxu0 %v376
  %431 = vmatpush.msra.mxu0 %v375
  %432 = vmatpush.msra.mxu0 %v374
  %433 = vmatpush.msra.mxu0 %v373
  %434 = vmatpush.msra.mxu0 %v372
  %435 = vmatpush.msra.mxu0 %v371
  %436 = vmatpush.msra.mxu0 %v370
  %437 = vmatpush.msra.mxu0 %v369
  %438 = vmatpush.msra.mxu0 %v368
  %439 = vmatpush.msra.mxu0 %v367
  %440 = vmatpush.msra.mxu0 %v366
  %441 = vmatmul.f32.gmra.mxu0 %v20
  %v442 = vpop.f32.mrf.mxu0
  %v443 = vadd.f32 %v91, %v442
  %444 = vmatmul.f32.gmra.mxu0 %v24
  %v445 = vpop.f32.mrf.mxu0
  %v446 = vadd.f32 %v96, %v445
  %447 = vdwg.mxu0
  %448 = vmatpush.msra.mxu0 %v397
  %449 = vmatpush.msra.mxu0 %v396
  %450 = vmatpush.msra.mxu0 %v395
  %451 = vmatpush.msra.mxu0 %v394
  %452 = vmatpush.msra.mxu0 %v393
  %453 = vmatpush.msra.mxu0 %v392
  %454 = vmatpush.msra.mxu0 %v391
  %455 = vmatpush.msra.mxu0 %v390
  %456 = vmatpush.msra.mxu0 %v389
  %457 = vmatpush.msra.mxu0 %v388
  %458 = vmatpush.msra.mxu0 %v387
  %459 = vmatpush.msra.mxu0 %v386
  %460 = vmatpush.msra.mxu0 %v385
  %461 = vmatpush.msra.mxu0 %v384
  %462 = vmatpush.msra.mxu0 %v383
  %463 = vmatpush.msra.mxu0 %v382
  %464 = vmatmul.f32.gmra.mxu0 %v21
  %v465 = vpop.f32.mrf.mxu0
  %v466 = vadd.f32 %v443, %v465
  %467 = vmatmul.f32.gmra.mxu0 %v25
  %v468 = vpop.f32.mrf.mxu0
  %v469 = vadd.f32 %v446, %v468
  %470 = vdwg.mxu0
  %471 = vmatpush.msra.mxu0 %v413
  %472 = vmatpush.msra.mxu0 %v412
  %473 = vmatpush.msra.mxu0 %v411
  %474 = vmatpush.msra.mxu0 %v410
  %475 = vmatpush.msra.mxu0 %v409
  %476 = vmatpush.msra.mxu0 %v408
  %477 = vmatpush.msra.mxu0 %v407
  %478 = vmatpush.msra.mxu0 %v406
  %479 = vmatpush.msra.mxu0 %v405
  %480 = vmatpush.msra.mxu0 %v404
  %481 = vmatpush.msra.mxu0 %v403
  %482 = vmatpush.msra.mxu0 %v402
  %483 = vmatpush.msra.mxu0 %v401
  %484 = vmatpush.msra.mxu0 %v400
  %485 = vmatpush.msra.mxu0 %v399
  %486 = vmatpush.msra.mxu0 %v398
  %487 = vmatmul.f32.gmra.mxu0 %v22
  %v488 = vpop.f32.mrf.mxu0
  %v489 = vadd.f32 %v466, %v488
  %490 = vmatmul.f32.gmra.mxu0 %v26
  %v491 = vpop.f32.mrf.mxu0
  %v492 = vadd.f32 %v469, %v491
  %493 = vdwg.mxu0
  %494 = vmatpush.msra.mxu0 0.0
  %495 = vmatpush.msra.mxu0 0.0
  %496 = vmatpush.msra.mxu0 0.0
  %497 = vmatpush.msra.mxu0 0.0
  %498 = vmatpush.msra.mxu0 0.0
  %499 = vmatpush.msra.mxu0 0.0
  %500 = vmatpush.msra.mxu0 0.0
  %501 = vmatpush.msra.mxu0 0.0
  %502 = vmatpush.msra.mxu0 %v423
  %503 = vmatpush.msra.mxu0 %v420
  %504 = vmatpush.msra.mxu0 %v419
  %505 = vmatpush.msra.mxu0 %v418
  %506 = vmatpush.msra.mxu0 %v417
  %507 = vmatpush.msra.mxu0 %v416
  %508 = vmatpush.msra.mxu0 %v415
  %509 = vmatpush.msra.mxu0 %v414
  %510 = vmatmul.f32.gmra.mxu0 %v100
  %v511 = vpop.f32.mrf.mxu0
  %v512 = vadd.f32 %v489, %v511
  %513 = vmatmul.f32.gmra.mxu0 %v103
  %v514 = vpop.f32.mrf.mxu0
  %v515 = vadd.f32 %v492, %v514
  %516 = vdwg.mxu0
  %v517 = vmul.f32 %v512, %v512
  %v518 = vmul.f32 %v515, %v515
  %v519 = vmul.f32 %v512, 0.005589375
  %v520 = vmul.f32 %v515, 0.005589375
  %v521 = vmul.f32 %v517, %v519
  %v522 = vmul.f32 %v518, %v520
  %s523 = scalar_lea.vmem %s0, 1344
  %v524 = vld [vmem:[%s523] sm:$0xff]
  %v525 = vld [vmem:[%s523 + $0x8] sm:$0xff]
  %v526 = vld [vmem:[%s523 + $0x10] sm:$0xff]
  %v527 = vld [vmem:[%s523 + $0x18] sm:$0xff]
  %v528 = vld [vmem:[%s523 + $0x20] sm:$0xff]
  %v529 = vld [vmem:[%s523 + $0x28] sm:$0xff]
  %v530 = vld [vmem:[%s523 + $0x30] sm:$0xff]
  %v531 = vld [vmem:[%s523 + $0x38] sm:$0xff]
  %v532 = vld [vmem:[%s523 + $0x40] sm:$0xff]
  %v533 = vld [vmem:[%s523 + $0x48] sm:$0xff]
  %v534 = vld [vmem:[%s523 + $0x50] sm:$0xff]
  %v535 = vld [vmem:[%s523 + $0x58] sm:$0xff]
  %v536 = vld [vmem:[%s523 + $0x60] sm:$0xff]
  %v537 = vld [vmem:[%s523 + $0x68] sm:$0xff]
  %v538 = vld [vmem:[%s523 + $0x70] sm:$0xff]
  %v539 = vld [vmem:[%s523 + $0x78] sm:$0xff]
  %v540 = vld [vmem:[%s523 + $0x80] sm:$0xff]
  %v541 = vld [vmem:[%s523 + $0x88] sm:$0xff]
  %v542 = vld [vmem:[%s523 + $0x90] sm:$0xff]
  %v543 = vld [vmem:[%s523 + $0x98] sm:$0xff]
  %v544 = vld [vmem:[%s523 + $0xa0] sm:$0xff]
  %v545 = vld [vmem:[%s523 + $0xa8] sm:$0xff]
  %v546 = vld [vmem:[%s523 + $0xb0] sm:$0xff]
  %v547 = vld [vmem:[%s523 + $0xb8] sm:$0xff]
  %v548 = vld [vmem:[%s523 + $0xc0] sm:$0xff]
  %v549 = vld [vmem:[%s523 + $0xc8] sm:$0xff]
  %v550 = vld [vmem:[%s523 + $0xd0] sm:$0xff]
  %v551 = vld [vmem:[%s523 + $0xd8] sm:$0xff]
  %v552 = vld [vmem:[%s523 + $0xe0] sm:$0xff]
  %v553 = vld [vmem:[%s523 + $0xe8] sm:$0xff]
  %v554 = vld [vmem:[%s523 + $0xf0] sm:$0xff]
  %v555 = vld [vmem:[%s523 + $0xf8] sm:$0xff]
  %v556 = vld [vmem:[%s523 + $0x100] sm:$0xff]
  %v557 = vld [vmem:[%s523 + $0x108] sm:$0xff]
  %v558 = vld [vmem:[%s523 + $0x110] sm:$0xff]
  %v559 = vld [vmem:[%s523 + $0x118] sm:$0xff]
  %v560 = vld [vmem:[%s523 + $0x120] sm:$0xff]
  %v561 = vld [vmem:[%s523 + $0x128] sm:$0xff]
  %v562 = vld [vmem:[%s523 + $0x130] sm:$0xff]
  %v563 = vld [vmem:[%s523 + $0x138] sm:$0xff]
  %v564 = vld [vmem:[%s523 + $0x140] sm:$0xff]
  %v565 = vld [vmem:[%s523 + $0x148] sm:$0xff]
  %v566 = vld [vmem:[%s523 + $0x150] sm:$0xff]
  %v567 = vld [vmem:[%s523 + $0x158] sm:$0xff]
  %v568 = vld [vmem:[%s523 + $0x160] sm:$0xff]
  %v569 = vld [vmem:[%s523 + $0x168] sm:$0xff]
  %v570 = vld [vmem:[%s523 + $0x170] sm:$0xff]
  %v571 = vld [vmem:[%s523 + $0x178] sm:$0xff]
  %v572 = vld [vmem:[%s523 + $0x180] sm:$0xff]
  %v573 = vld [vmem:[%s523 + $0x188] sm:$0xff]
  %v574 = vld [vmem:[%s523 + $0x190] sm:$0xff]
  %v575 = vld [vmem:[%s523 + $0x198] sm:$0xff]
  %v576 = vld [vmem:[%s523 + $0x1a0] sm:$0xff]
  %v577 = vld [vmem:[%s523 + $0x1a8] sm:$0xff]
  %v578 = vld [vmem:[%s523 + $0x1b0] sm:$0xff]
  %v579 = vld [vmem:[%s523 + $0x1b8] sm:$0x1]
  %v581 = vsel %vm105, %v579, 0
  %583 = vmatpush.msra.mxu0 %v539
  %584 = vmatpush.msra.mxu0 %v538
  %585 = vmatpush.msra.mxu0 %v537
  %586 = vmatpush.msra.mxu0 %v536
  %587 = vmatpush.msra.mxu0 %v535
  %588 = vmatpush.msra.mxu0 %v534
  %589 = vmatpush.msra.mxu0 %v533
  %590 = vmatpush.msra.mxu0 %v532
  %591 = vmatpush.msra.mxu0 %v531
  %592 = vmatpush.msra.mxu0 %v530
  %593 = vmatpush.msra.mxu0 %v529
  %594 = vmatpush.msra.mxu0 %v528
  %595 = vmatpush.msra.mxu0 %v527
  %596 = vmatpush.msra.mxu0 %v526
  %597 = vmatpush.msra.mxu0 %v525
  %598 = vmatpush.msra.mxu0 %v524
  %599 = vmatmul.f32.gmra.mxu0 %v20
  %v600 = vpop.f32.mrf.mxu0
  %v601 = vadd.f32 %v91, %v600
  %602 = vmatmul.f32.gmra.mxu0 %v24
  %v603 = vpop.f32.mrf.mxu0
  %v604 = vadd.f32 %v96, %v603
  %605 = vdwg.mxu0
  %606 = vmatpush.msra.mxu0 %v555
  %607 = vmatpush.msra.mxu0 %v554
  %608 = vmatpush.msra.mxu0 %v553
  %609 = vmatpush.msra.mxu0 %v552
  %610 = vmatpush.msra.mxu0 %v551
  %611 = vmatpush.msra.mxu0 %v550
  %612 = vmatpush.msra.mxu0 %v549
  %613 = vmatpush.msra.mxu0 %v548
  %614 = vmatpush.msra.mxu0 %v547
  %615 = vmatpush.msra.mxu0 %v546
  %616 = vmatpush.msra.mxu0 %v545
  %617 = vmatpush.msra.mxu0 %v544
  %618 = vmatpush.msra.mxu0 %v543
  %619 = vmatpush.msra.mxu0 %v542
  %620 = vmatpush.msra.mxu0 %v541
  %621 = vmatpush.msra.mxu0 %v540
  %622 = vmatmul.f32.gmra.mxu0 %v21
  %v623 = vpop.f32.mrf.mxu0
  %v624 = vadd.f32 %v601, %v623
  %625 = vmatmul.f32.gmra.mxu0 %v25
  %v626 = vpop.f32.mrf.mxu0
  %v627 = vadd.f32 %v604, %v626
  %628 = vdwg.mxu0
  %629 = vmatpush.msra.mxu0 %v571
  %630 = vmatpush.msra.mxu0 %v570
  %631 = vmatpush.msra.mxu0 %v569
  %632 = vmatpush.msra.mxu0 %v568
  %633 = vmatpush.msra.mxu0 %v567
  %634 = vmatpush.msra.mxu0 %v566
  %635 = vmatpush.msra.mxu0 %v565
  %636 = vmatpush.msra.mxu0 %v564
  %637 = vmatpush.msra.mxu0 %v563
  %638 = vmatpush.msra.mxu0 %v562
  %639 = vmatpush.msra.mxu0 %v561
  %640 = vmatpush.msra.mxu0 %v560
  %641 = vmatpush.msra.mxu0 %v559
  %642 = vmatpush.msra.mxu0 %v558
  %643 = vmatpush.msra.mxu0 %v557
  %644 = vmatpush.msra.mxu0 %v556
  %645 = vmatmul.f32.gmra.mxu0 %v22
  %v646 = vpop.f32.mrf.mxu0
  %v647 = vadd.f32 %v624, %v646
  %648 = vmatmul.f32.gmra.mxu0 %v26
  %v649 = vpop.f32.mrf.mxu0
  %v650 = vadd.f32 %v627, %v649
  %651 = vdwg.mxu0
  %652 = vmatpush.msra.mxu0 0.0
  %653 = vmatpush.msra.mxu0 0.0
  %654 = vmatpush.msra.mxu0 0.0
  %655 = vmatpush.msra.mxu0 0.0
  %656 = vmatpush.msra.mxu0 0.0
  %657 = vmatpush.msra.mxu0 0.0
  %658 = vmatpush.msra.mxu0 0.0
  %659 = vmatpush.msra.mxu0 0.0
  %660 = vmatpush.msra.mxu0 %v581
  %661 = vmatpush.msra.mxu0 %v578
  %662 = vmatpush.msra.mxu0 %v577
  %663 = vmatpush.msra.mxu0 %v576
  %664 = vmatpush.msra.mxu0 %v575
  %665 = vmatpush.msra.mxu0 %v574
  %666 = vmatpush.msra.mxu0 %v573
  %667 = vmatpush.msra.mxu0 %v572
  %668 = vmatmul.f32.gmra.mxu0 %v100
  %v669 = vpop.f32.mrf.mxu0
  %v670 = vadd.f32 %v647, %v669
  %671 = vmatmul.f32.gmra.mxu0 %v103
  %v672 = vpop.f32.mrf.mxu0
  %v673 = vadd.f32 %v650, %v672
  %674 = vdwg.mxu0
  %v675 = vmul.f32 %v670, %v670
  %v676 = vmul.f32 %v673, %v673
  %v677 = vmul.f32 %v670, 0.005589375
  %v678 = vmul.f32 %v673, 0.005589375
  %v679 = vmul.f32 %v675, %v677
  %v680 = vmul.f32 %v676, %v678
  %s681 = scalar_lea.vmem %s0, 1792
  %v682 = vld [vmem:[%s681] sm:$0xff]
  %v683 = vld [vmem:[%s681 + $0x8] sm:$0xff]
  %v684 = vld [vmem:[%s681 + $0x10] sm:$0xff]
  %v685 = vld [vmem:[%s681 + $0x18] sm:$0xff]
  %v686 = vld [vmem:[%s681 + $0x20] sm:$0xff]
  %v687 = vld [vmem:[%s681 + $0x28] sm:$0xff]
  %v688 = vld [vmem:[%s681 + $0x30] sm:$0xff]
  %v689 = vld [vmem:[%s681 + $0x38] sm:$0xff]
  %v690 = vld [vmem:[%s681 + $0x40] sm:$0xff]
  %v691 = vld [vmem:[%s681 + $0x48] sm:$0xff]
  %v692 = vld [vmem:[%s681 + $0x50] sm:$0xff]
  %v693 = vld [vmem:[%s681 + $0x58] sm:$0xff]
  %v694 = vld [vmem:[%s681 + $0x60] sm:$0xff]
  %v695 = vld [vmem:[%s681 + $0x68] sm:$0xff]
  %v696 = vld [vmem:[%s681 + $0x70] sm:$0xff]
  %v697 = vld [vmem:[%s681 + $0x78] sm:$0xff]
  %v698 = vld [vmem:[%s681 + $0x80] sm:$0xff]
  %v699 = vld [vmem:[%s681 + $0x88] sm:$0xff]
  %v700 = vld [vmem:[%s681 + $0x90] sm:$0xff]
  %v701 = vld [vmem:[%s681 + $0x98] sm:$0xff]
  %v702 = vld [vmem:[%s681 + $0xa0] sm:$0xff]
  %v703 = vld [vmem:[%s681 + $0xa8] sm:$0xff]
  %v704 = vld [vmem:[%s681 + $0xb0] sm:$0xff]
  %v705 = vld [vmem:[%s681 + $0xb8] sm:$0xff]
  %v706 = vld [vmem:[%s681 + $0xc0] sm:$0xff]
  %v707 = vld [vmem:[%s681 + $0xc8] sm:$0xff]
  %v708 = vld [vmem:[%s681 + $0xd0] sm:$0xff]
  %v709 = vld [vmem:[%s681 + $0xd8] sm:$0xff]
  %v710 = vld [vmem:[%s681 + $0xe0] sm:$0xff]
  %v711 = vld [vmem:[%s681 + $0xe8] sm:$0xff]
  %v712 = vld [vmem:[%s681 + $0xf0] sm:$0xff]
  %v713 = vld [vmem:[%s681 + $0xf8] sm:$0xff]
  %v714 = vld [vmem:[%s681 + $0x100] sm:$0xff]
  %v715 = vld [vmem:[%s681 + $0x108] sm:$0xff]
  %v716 = vld [vmem:[%s681 + $0x110] sm:$0xff]
  %v717 = vld [vmem:[%s681 + $0x118] sm:$0xff]
  %v718 = vld [vmem:[%s681 + $0x120] sm:$0xff]
  %v719 = vld [vmem:[%s681 + $0x128] sm:$0xff]
  %v720 = vld [vmem:[%s681 + $0x130] sm:$0xff]
  %v721 = vld [vmem:[%s681 + $0x138] sm:$0xff]
  %v722 = vld [vmem:[%s681 + $0x140] sm:$0xff]
  %v723 = vld [vmem:[%s681 + $0x148] sm:$0xff]
  %v724 = vld [vmem:[%s681 + $0x150] sm:$0xff]
  %v725 = vld [vmem:[%s681 + $0x158] sm:$0xff]
  %v726 = vld [vmem:[%s681 + $0x160] sm:$0xff]
  %v727 = vld [vmem:[%s681 + $0x168] sm:$0xff]
  %v728 = vld [vmem:[%s681 + $0x170] sm:$0xff]
  %v729 = vld [vmem:[%s681 + $0x178] sm:$0xff]
  %v730 = vld [vmem:[%s681 + $0x180] sm:$0xff]
  %v731 = vld [vmem:[%s681 + $0x188] sm:$0xff]
  %v732 = vld [vmem:[%s681 + $0x190] sm:$0xff]
  %v733 = vld [vmem:[%s681 + $0x198] sm:$0xff]
  %v734 = vld [vmem:[%s681 + $0x1a0] sm:$0xff]
  %v735 = vld [vmem:[%s681 + $0x1a8] sm:$0xff]
  %v736 = vld [vmem:[%s681 + $0x1b0] sm:$0xff]
  %v737 = vld [vmem:[%s681 + $0x1b8] sm:$0x1]
  %v739 = vsel %vm105, %v737, 0
  %741 = vmatpush.msra.mxu0 %v697
  %742 = vmatpush.msra.mxu0 %v696
  %743 = vmatpush.msra.mxu0 %v695
  %744 = vmatpush.msra.mxu0 %v694
  %745 = vmatpush.msra.mxu0 %v693
  %746 = vmatpush.msra.mxu0 %v692
  %747 = vmatpush.msra.mxu0 %v691
  %748 = vmatpush.msra.mxu0 %v690
  %749 = vmatpush.msra.mxu0 %v689
  %750 = vmatpush.msra.mxu0 %v688
  %751 = vmatpush.msra.mxu0 %v687
  %752 = vmatpush.msra.mxu0 %v686
  %753 = vmatpush.msra.mxu0 %v685
  %754 = vmatpush.msra.mxu0 %v684
  %755 = vmatpush.msra.mxu0 %v683
  %756 = vmatpush.msra.mxu0 %v682
  %757 = vmatmul.f32.gmra.mxu0 %v20
  %v758 = vpop.f32.mrf.mxu0
  %v759 = vadd.f32 %v91, %v758
  %760 = vmatmul.f32.gmra.mxu0 %v24
  %v761 = vpop.f32.mrf.mxu0
  %v762 = vadd.f32 %v96, %v761
  %763 = vdwg.mxu0
  %764 = vmatpush.msra.mxu0 %v713
  %765 = vmatpush.msra.mxu0 %v712
  %766 = vmatpush.msra.mxu0 %v711
  %767 = vmatpush.msra.mxu0 %v710
  %768 = vmatpush.msra.mxu0 %v709
  %769 = vmatpush.msra.mxu0 %v708
  %770 = vmatpush.msra.mxu0 %v707
  %771 = vmatpush.msra.mxu0 %v706
  %772 = vmatpush.msra.mxu0 %v705
  %773 = vmatpush.msra.mxu0 %v704
  %774 = vmatpush.msra.mxu0 %v703
  %775 = vmatpush.msra.mxu0 %v702
  %776 = vmatpush.msra.mxu0 %v701
  %777 = vmatpush.msra.mxu0 %v700
  %778 = vmatpush.msra.mxu0 %v699
  %779 = vmatpush.msra.mxu0 %v698
  %780 = vmatmul.f32.gmra.mxu0 %v21
  %v781 = vpop.f32.mrf.mxu0
  %v782 = vadd.f32 %v759, %v781
  %783 = vmatmul.f32.gmra.mxu0 %v25
  %v784 = vpop.f32.mrf.mxu0
  %v785 = vadd.f32 %v762, %v784
  %786 = vdwg.mxu0
  %787 = vmatpush.msra.mxu0 %v729
  %788 = vmatpush.msra.mxu0 %v728
  %789 = vmatpush.msra.mxu0 %v727
  %790 = vmatpush.msra.mxu0 %v726
  %791 = vmatpush.msra.mxu0 %v725
  %792 = vmatpush.msra.mxu0 %v724
  %793 = vmatpush.msra.mxu0 %v723
  %794 = vmatpush.msra.mxu0 %v722
  %795 = vmatpush.msra.mxu0 %v721
  %796 = vmatpush.msra.mxu0 %v720
  %797 = vmatpush.msra.mxu0 %v719
  %798 = vmatpush.msra.mxu0 %v718
  %799 = vmatpush.msra.mxu0 %v717
  %800 = vmatpush.msra.mxu0 %v716
  %801 = vmatpush.msra.mxu0 %v715
  %802 = vmatpush.msra.mxu0 %v714
  %803 = vmatmul.f32.gmra.mxu0 %v22
  %v804 = vpop.f32.mrf.mxu0
  %v805 = vadd.f32 %v782, %v804
  %806 = vmatmul.f32.gmra.mxu0 %v26
  %v807 = vpop.f32.mrf.mxu0
  %v808 = vadd.f32 %v785, %v807
  %809 = vdwg.mxu0
  %810 = vmatpush.msra.mxu0 0.0
  %811 = vmatpush.msra.mxu0 0.0
  %812 = vmatpush.msra.mxu0 0.0
  %813 = vmatpush.msra.mxu0 0.0
  %814 = vmatpush.msra.mxu0 0.0
  %815 = vmatpush.msra.mxu0 0.0
  %816 = vmatpush.msra.mxu0 0.0
  %817 = vmatpush.msra.mxu0 0.0
  %818 = vmatpush.msra.mxu0 %v739
  %819 = vmatpush.msra.mxu0 %v736
  %820 = vmatpush.msra.mxu0 %v735
  %821 = vmatpush.msra.mxu0 %v734
  %822 = vmatpush.msra.mxu0 %v733
  %823 = vmatpush.msra.mxu0 %v732
  %824 = vmatpush.msra.mxu0 %v731
  %825 = vmatpush.msra.mxu0 %v730
  %826 = vmatmul.f32.gmra.mxu0 %v100
  %v827 = vpop.f32.mrf.mxu0
  %v828 = vadd.f32 %v805, %v827
  %829 = vmatmul.f32.gmra.mxu0 %v103
  %v830 = vpop.f32.mrf.mxu0
  %v831 = vadd.f32 %v808, %v830
  %832 = vdwg.mxu0
  %v833 = vmul.f32 %v828, %v828
  %v834 = vmul.f32 %v831, %v831
  %v835 = vmul.f32 %v828, 0.005589375
  %v836 = vmul.f32 %v831, 0.005589375
  %v837 = vmul.f32 %v833, %v835
  %v838 = vmul.f32 %v834, %v836
  %s839 = scalar_lea.vmem %s0, 2240
  %v840 = vld [vmem:[%s839] sm:$0xff]
  %v841 = vld [vmem:[%s839 + $0x8] sm:$0xff]
  %v842 = vld [vmem:[%s839 + $0x10] sm:$0xff]
  %v843 = vld [vmem:[%s839 + $0x18] sm:$0xff]
  %v844 = vld [vmem:[%s839 + $0x20] sm:$0xff]
  %v845 = vld [vmem:[%s839 + $0x28] sm:$0xff]
  %v846 = vld [vmem:[%s839 + $0x30] sm:$0xff]
  %v847 = vld [vmem:[%s839 + $0x38] sm:$0xff]
  %v848 = vld [vmem:[%s839 + $0x40] sm:$0xff]
  %v849 = vld [vmem:[%s839 + $0x48] sm:$0xff]
  %v850 = vld [vmem:[%s839 + $0x50] sm:$0xff]
  %v851 = vld [vmem:[%s839 + $0x58] sm:$0xff]
  %v852 = vld [vmem:[%s839 + $0x60] sm:$0xff]
  %v853 = vld [vmem:[%s839 + $0x68] sm:$0xff]
  %v854 = vld [vmem:[%s839 + $0x70] sm:$0xff]
  %v855 = vld [vmem:[%s839 + $0x78] sm:$0xff]
  %v856 = vld [vmem:[%s839 + $0x80] sm:$0xff]
  %v857 = vld [vmem:[%s839 + $0x88] sm:$0xff]
  %v858 = vld [vmem:[%s839 + $0x90] sm:$0xff]
  %v859 = vld [vmem:[%s839 + $0x98] sm:$0xff]
  %v860 = vld [vmem:[%s839 + $0xa0] sm:$0xff]
  %v861 = vld [vmem:[%s839 + $0xa8] sm:$0xff]
  %v862 = vld [vmem:[%s839 + $0xb0] sm:$0xff]
  %v863 = vld [vmem:[%s839 + $0xb8] sm:$0xff]
  %v864 = vld [vmem:[%s839 + $0xc0] sm:$0xff]
  %v865 = vld [vmem:[%s839 + $0xc8] sm:$0xff]
  %v866 = vld [vmem:[%s839 + $0xd0] sm:$0xff]
  %v867 = vld [vmem:[%s839 + $0xd8] sm:$0xff]
  %v868 = vld [vmem:[%s839 + $0xe0] sm:$0xff]
  %v869 = vld [vmem:[%s839 + $0xe8] sm:$0xff]
  %v870 = vld [vmem:[%s839 + $0xf0] sm:$0xff]
  %v871 = vld [vmem:[%s839 + $0xf8] sm:$0xff]
  %v872 = vld [vmem:[%s839 + $0x100] sm:$0xff]
  %v873 = vld [vmem:[%s839 + $0x108] sm:$0xff]
  %v874 = vld [vmem:[%s839 + $0x110] sm:$0xff]
  %v875 = vld [vmem:[%s839 + $0x118] sm:$0xff]
  %v876 = vld [vmem:[%s839 + $0x120] sm:$0xff]
  %v877 = vld [vmem:[%s839 + $0x128] sm:$0xff]
  %v878 = vld [vmem:[%s839 + $0x130] sm:$0xff]
  %v879 = vld [vmem:[%s839 + $0x138] sm:$0xff]
  %v880 = vld [vmem:[%s839 + $0x140] sm:$0xff]
  %v881 = vld [vmem:[%s839 + $0x148] sm:$0xff]
  %v882 = vld [vmem:[%s839 + $0x150] sm:$0xff]
  %v883 = vld [vmem:[%s839 + $0x158] sm:$0xff]
  %v884 = vld [vmem:[%s839 + $0x160] sm:$0xff]
  %v885 = vld [vmem:[%s839 + $0x168] sm:$0xff]
  %v886 = vld [vmem:[%s839 + $0x170] sm:$0xff]
  %v887 = vld [vmem:[%s839 + $0x178] sm:$0xff]
  %v888 = vld [vmem:[%s839 + $0x180] sm:$0xff]
  %v889 = vld [vmem:[%s839 + $0x188] sm:$0xff]
  %v890 = vld [vmem:[%s839 + $0x190] sm:$0xff]
  %v891 = vld [vmem:[%s839 + $0x198] sm:$0xff]
  %v892 = vld [vmem:[%s839 + $0x1a0] sm:$0xff]
  %v893 = vld [vmem:[%s839 + $0x1a8] sm:$0xff]
  %v894 = vld [vmem:[%s839 + $0x1b0] sm:$0xff]
  %v895 = vld [vmem:[%s839 + $0x1b8] sm:$0x1]
  %v897 = vsel %vm105, %v895, 0
  %899 = vmatpush.msra.mxu0 %v855
  %900 = vmatpush.msra.mxu0 %v854
  %901 = vmatpush.msra.mxu0 %v853
  %902 = vmatpush.msra.mxu0 %v852
  %903 = vmatpush.msra.mxu0 %v851
  %904 = vmatpush.msra.mxu0 %v850
  %905 = vmatpush.msra.mxu0 %v849
  %906 = vmatpush.msra.mxu0 %v848
  %907 = vmatpush.msra.mxu0 %v847
  %908 = vmatpush.msra.mxu0 %v846
  %909 = vmatpush.msra.mxu0 %v845
  %910 = vmatpush.msra.mxu0 %v844
  %911 = vmatpush.msra.mxu0 %v843
  %912 = vmatpush.msra.mxu0 %v842
  %913 = vmatpush.msra.mxu0 %v841
  %914 = vmatpush.msra.mxu0 %v840
  %915 = vmatmul.f32.gmra.mxu0 %v20
  %v916 = vpop.f32.mrf.mxu0
  %v917 = vadd.f32 %v91, %v916
  %918 = vmatmul.f32.gmra.mxu0 %v24
  %v919 = vpop.f32.mrf.mxu0
  %v920 = vadd.f32 %v96, %v919
  %921 = vdwg.mxu0
  %922 = vmatpush.msra.mxu0 %v871
  %923 = vmatpush.msra.mxu0 %v870
  %924 = vmatpush.msra.mxu0 %v869
  %925 = vmatpush.msra.mxu0 %v868
  %926 = vmatpush.msra.mxu0 %v867
  %927 = vmatpush.msra.mxu0 %v866
  %928 = vmatpush.msra.mxu0 %v865
  %929 = vmatpush.msra.mxu0 %v864
  %930 = vmatpush.msra.mxu0 %v863
  %931 = vmatpush.msra.mxu0 %v862
  %932 = vmatpush.msra.mxu0 %v861
  %933 = vmatpush.msra.mxu0 %v860
  %934 = vmatpush.msra.mxu0 %v859
  %935 = vmatpush.msra.mxu0 %v858
  %936 = vmatpush.msra.mxu0 %v857
  %937 = vmatpush.msra.mxu0 %v856
  %938 = vmatmul.f32.gmra.mxu0 %v21
  %v939 = vpop.f32.mrf.mxu0
  %v940 = vadd.f32 %v917, %v939
  %941 = vmatmul.f32.gmra.mxu0 %v25
  %v942 = vpop.f32.mrf.mxu0
  %v943 = vadd.f32 %v920, %v942
  %944 = vdwg.mxu0
  %945 = vmatpush.msra.mxu0 %v887
  %946 = vmatpush.msra.mxu0 %v886
  %947 = vmatpush.msra.mxu0 %v885
  %948 = vmatpush.msra.mxu0 %v884
  %949 = vmatpush.msra.mxu0 %v883
  %950 = vmatpush.msra.mxu0 %v882
  %951 = vmatpush.msra.mxu0 %v881
  %952 = vmatpush.msra.mxu0 %v880
  %953 = vmatpush.msra.mxu0 %v879
  %954 = vmatpush.msra.mxu0 %v878
  %955 = vmatpush.msra.mxu0 %v877
  %956 = vmatpush.msra.mxu0 %v876
  %957 = vmatpush.msra.mxu0 %v875
  %958 = vmatpush.msra.mxu0 %v874
  %959 = vmatpush.msra.mxu0 %v873
  %960 = vmatpush.msra.mxu0 %v872
  %961 = vmatmul.f32.gmra.mxu0 %v22
  %v962 = vpop.f32.mrf.mxu0
  %v963 = vadd.f32 %v940, %v962
  %964 = vmatmul.f32.gmra.mxu0 %v26
  %v965 = vpop.f32.mrf.mxu0
  %v966 = vadd.f32 %v943, %v965
  %967 = vdwg.mxu0
  %968 = vmatpush.msra.mxu0 0.0
  %969 = vmatpush.msra.mxu0 0.0
  %970 = vmatpush.msra.mxu0 0.0
  %971 = vmatpush.msra.mxu0 0.0
  %972 = vmatpush.msra.mxu0 0.0
  %973 = vmatpush.msra.mxu0 0.0
  %974 = vmatpush.msra.mxu0 0.0
  %975 = vmatpush.msra.mxu0 0.0
  %976 = vmatpush.msra.mxu0 %v897
  %977 = vmatpush.msra.mxu0 %v894
  %978 = vmatpush.msra.mxu0 %v893
  %979 = vmatpush.msra.mxu0 %v892
  %980 = vmatpush.msra.mxu0 %v891
  %981 = vmatpush.msra.mxu0 %v890
  %982 = vmatpush.msra.mxu0 %v889
  %983 = vmatpush.msra.mxu0 %v888
  %984 = vmatmul.f32.gmra.mxu0 %v100
  %v985 = vpop.f32.mrf.mxu0
  %v986 = vadd.f32 %v963, %v985
  %987 = vmatmul.f32.gmra.mxu0 %v103
  %v988 = vpop.f32.mrf.mxu0
  %v989 = vadd.f32 %v966, %v988
  %990 = vdwg.mxu0
  %v991 = vmul.f32 %v986, %v986
  %v992 = vmul.f32 %v989, %v989
  %v993 = vmul.f32 %v986, 0.005589375
  %v994 = vmul.f32 %v989, 0.005589375
  %v995 = vmul.f32 %v991, %v993
  %v996 = vmul.f32 %v992, %v994
  %s997 = scalar_lea.vmem %s0, 2688
  %v998 = vld [vmem:[%s997] sm:$0xff]
  %v999 = vld [vmem:[%s997 + $0x8] sm:$0xff]
  %v1000 = vld [vmem:[%s997 + $0x10] sm:$0xff]
  %v1001 = vld [vmem:[%s997 + $0x18] sm:$0xff]
  %v1002 = vld [vmem:[%s997 + $0x20] sm:$0xff]
  %v1003 = vld [vmem:[%s997 + $0x28] sm:$0xff]
  %v1004 = vld [vmem:[%s997 + $0x30] sm:$0xff]
  %v1005 = vld [vmem:[%s997 + $0x38] sm:$0xff]
  %v1006 = vld [vmem:[%s997 + $0x40] sm:$0xff]
  %v1007 = vld [vmem:[%s997 + $0x48] sm:$0xff]
  %v1008 = vld [vmem:[%s997 + $0x50] sm:$0xff]
  %v1009 = vld [vmem:[%s997 + $0x58] sm:$0xff]
  %v1010 = vld [vmem:[%s997 + $0x60] sm:$0xff]
  %v1011 = vld [vmem:[%s997 + $0x68] sm:$0xff]
  %v1012 = vld [vmem:[%s997 + $0x70] sm:$0xff]
  %v1013 = vld [vmem:[%s997 + $0x78] sm:$0xff]
  %v1014 = vld [vmem:[%s997 + $0x80] sm:$0xff]
  %v1015 = vld [vmem:[%s997 + $0x88] sm:$0xff]
  %v1016 = vld [vmem:[%s997 + $0x90] sm:$0xff]
  %v1017 = vld [vmem:[%s997 + $0x98] sm:$0xff]
  %v1018 = vld [vmem:[%s997 + $0xa0] sm:$0xff]
  %v1019 = vld [vmem:[%s997 + $0xa8] sm:$0xff]
  %v1020 = vld [vmem:[%s997 + $0xb0] sm:$0xff]
  %v1021 = vld [vmem:[%s997 + $0xb8] sm:$0xff]
  %v1022 = vld [vmem:[%s997 + $0xc0] sm:$0xff]
  %v1023 = vld [vmem:[%s997 + $0xc8] sm:$0xff]
  %v1024 = vld [vmem:[%s997 + $0xd0] sm:$0xff]
  %v1025 = vld [vmem:[%s997 + $0xd8] sm:$0xff]
  %v1026 = vld [vmem:[%s997 + $0xe0] sm:$0xff]
  %v1027 = vld [vmem:[%s997 + $0xe8] sm:$0xff]
  %v1028 = vld [vmem:[%s997 + $0xf0] sm:$0xff]
  %v1029 = vld [vmem:[%s997 + $0xf8] sm:$0xff]
  %v1030 = vld [vmem:[%s997 + $0x100] sm:$0xff]
  %v1031 = vld [vmem:[%s997 + $0x108] sm:$0xff]
  %v1032 = vld [vmem:[%s997 + $0x110] sm:$0xff]
  %v1033 = vld [vmem:[%s997 + $0x118] sm:$0xff]
  %v1034 = vld [vmem:[%s997 + $0x120] sm:$0xff]
  %v1035 = vld [vmem:[%s997 + $0x128] sm:$0xff]
  %v1036 = vld [vmem:[%s997 + $0x130] sm:$0xff]
  %v1037 = vld [vmem:[%s997 + $0x138] sm:$0xff]
  %v1038 = vld [vmem:[%s997 + $0x140] sm:$0xff]
  %v1039 = vld [vmem:[%s997 + $0x148] sm:$0xff]
  %v1040 = vld [vmem:[%s997 + $0x150] sm:$0xff]
  %v1041 = vld [vmem:[%s997 + $0x158] sm:$0xff]
  %v1042 = vld [vmem:[%s997 + $0x160] sm:$0xff]
  %v1043 = vld [vmem:[%s997 + $0x168] sm:$0xff]
  %v1044 = vld [vmem:[%s997 + $0x170] sm:$0xff]
  %v1045 = vld [vmem:[%s997 + $0x178] sm:$0xff]
  %v1046 = vld [vmem:[%s997 + $0x180] sm:$0xff]
  %v1047 = vld [vmem:[%s997 + $0x188] sm:$0xff]
  %v1048 = vld [vmem:[%s997 + $0x190] sm:$0xff]
  %v1049 = vld [vmem:[%s997 + $0x198] sm:$0xff]
  %v1050 = vld [vmem:[%s997 + $0x1a0] sm:$0xff]
  %v1051 = vld [vmem:[%s997 + $0x1a8] sm:$0xff]
  %v1052 = vld [vmem:[%s997 + $0x1b0] sm:$0xff]
  %v1053 = vld [vmem:[%s997 + $0x1b8] sm:$0x1]
  %v1055 = vsel %vm105, %v1053, 0
  %1057 = vmatpush.msra.mxu0 %v1013
  %1058 = vmatpush.msra.mxu0 %v1012
  %1059 = vmatpush.msra.mxu0 %v1011
  %1060 = vmatpush.msra.mxu0 %v1010
  %1061 = vmatpush.msra.mxu0 %v1009
  %1062 = vmatpush.msra.mxu0 %v1008
  %1063 = vmatpush.msra.mxu0 %v1007
  %1064 = vmatpush.msra.mxu0 %v1006
  %1065 = vmatpush.msra.mxu0 %v1005
  %1066 = vmatpush.msra.mxu0 %v1004
  %1067 = vmatpush.msra.mxu0 %v1003
  %1068 = vmatpush.msra.mxu0 %v1002
  %1069 = vmatpush.msra.mxu0 %v1001
  %1070 = vmatpush.msra.mxu0 %v1000
  %1071 = vmatpush.msra.mxu0 %v999
  %1072 = vmatpush.msra.mxu0 %v998
  %1073 = vmatmul.f32.gmra.mxu0 %v20
  %v1074 = vpop.f32.mrf.mxu0
  %v1075 = vadd.f32 %v91, %v1074
  %1076 = vmatmul.f32.gmra.mxu0 %v24
  %v1077 = vpop.f32.mrf.mxu0
  %v1078 = vadd.f32 %v96, %v1077
  %1079 = vdwg.mxu0
  %1080 = vmatpush.msra.mxu0 %v1029
  %1081 = vmatpush.msra.mxu0 %v1028
  %1082 = vmatpush.msra.mxu0 %v1027
  %1083 = vmatpush.msra.mxu0 %v1026
  %1084 = vmatpush.msra.mxu0 %v1025
  %1085 = vmatpush.msra.mxu0 %v1024
  %1086 = vmatpush.msra.mxu0 %v1023
  %1087 = vmatpush.msra.mxu0 %v1022
  %1088 = vmatpush.msra.mxu0 %v1021
  %1089 = vmatpush.msra.mxu0 %v1020
  %1090 = vmatpush.msra.mxu0 %v1019
  %1091 = vmatpush.msra.mxu0 %v1018
  %1092 = vmatpush.msra.mxu0 %v1017
  %1093 = vmatpush.msra.mxu0 %v1016
  %1094 = vmatpush.msra.mxu0 %v1015
  %1095 = vmatpush.msra.mxu0 %v1014
  %1096 = vmatmul.f32.gmra.mxu0 %v21
  %v1097 = vpop.f32.mrf.mxu0
  %v1098 = vadd.f32 %v1075, %v1097
  %1099 = vmatmul.f32.gmra.mxu0 %v25
  %v1100 = vpop.f32.mrf.mxu0
  %v1101 = vadd.f32 %v1078, %v1100
  %1102 = vdwg.mxu0
  %1103 = vmatpush.msra.mxu0 %v1045
  %1104 = vmatpush.msra.mxu0 %v1044
  %1105 = vmatpush.msra.mxu0 %v1043
  %1106 = vmatpush.msra.mxu0 %v1042
  %1107 = vmatpush.msra.mxu0 %v1041
  %1108 = vmatpush.msra.mxu0 %v1040
  %1109 = vmatpush.msra.mxu0 %v1039
  %1110 = vmatpush.msra.mxu0 %v1038
  %1111 = vmatpush.msra.mxu0 %v1037
  %1112 = vmatpush.msra.mxu0 %v1036
  %1113 = vmatpush.msra.mxu0 %v1035
  %1114 = vmatpush.msra.mxu0 %v1034
  %1115 = vmatpush.msra.mxu0 %v1033
  %1116 = vmatpush.msra.mxu0 %v1032
  %1117 = vmatpush.msra.mxu0 %v1031
  %1118 = vmatpush.msra.mxu0 %v1030
  %1119 = vmatmul.f32.gmra.mxu0 %v22
  %v1120 = vpop.f32.mrf.mxu0
  %v1121 = vadd.f32 %v1098, %v1120
  %1122 = vmatmul.f32.gmra.mxu0 %v26
  %v1123 = vpop.f32.mrf.mxu0
  %v1124 = vadd.f32 %v1101, %v1123
  %1125 = vdwg.mxu0
  %1126 = vmatpush.msra.mxu0 0.0
  %1127 = vmatpush.msra.mxu0 0.0
  %1128 = vmatpush.msra.mxu0 0.0
  %1129 = vmatpush.msra.mxu0 0.0
  %1130 = vmatpush.msra.mxu0 0.0
  %1131 = vmatpush.msra.mxu0 0.0
  %1132 = vmatpush.msra.mxu0 0.0
  %1133 = vmatpush.msra.mxu0 0.0
  %1134 = vmatpush.msra.mxu0 %v1055
  %1135 = vmatpush.msra.mxu0 %v1052
  %1136 = vmatpush.msra.mxu0 %v1051
  %1137 = vmatpush.msra.mxu0 %v1050
  %1138 = vmatpush.msra.mxu0 %v1049
  %1139 = vmatpush.msra.mxu0 %v1048
  %1140 = vmatpush.msra.mxu0 %v1047
  %1141 = vmatpush.msra.mxu0 %v1046
  %1142 = vmatmul.f32.gmra.mxu0 %v100
  %v1143 = vpop.f32.mrf.mxu0
  %v1144 = vadd.f32 %v1121, %v1143
  %1145 = vmatmul.f32.gmra.mxu0 %v103
  %v1146 = vpop.f32.mrf.mxu0
  %v1147 = vadd.f32 %v1124, %v1146
  %1148 = vdwg.mxu0
  %v1149 = vmul.f32 %v1144, %v1144
  %v1150 = vmul.f32 %v1147, %v1147
  %v1151 = vmul.f32 %v1144, 0.005589375
  %v1152 = vmul.f32 %v1147, 0.005589375
  %v1153 = vmul.f32 %v1149, %v1151
  %v1154 = vmul.f32 %v1150, %v1152
  %s1155 = scalar_lea.vmem %s0, 3136
  %v1156 = vld [vmem:[%s1155] sm:$0xff]
  %v1157 = vld [vmem:[%s1155 + $0x8] sm:$0xff]
  %v1158 = vld [vmem:[%s1155 + $0x10] sm:$0xff]
  %v1159 = vld [vmem:[%s1155 + $0x18] sm:$0xff]
  %v1160 = vld [vmem:[%s1155 + $0x20] sm:$0xff]
  %v1161 = vld [vmem:[%s1155 + $0x28] sm:$0xff]
  %v1162 = vld [vmem:[%s1155 + $0x30] sm:$0xff]
  %v1163 = vld [vmem:[%s1155 + $0x38] sm:$0xff]
  %v1164 = vld [vmem:[%s1155 + $0x40] sm:$0xff]
  %v1165 = vld [vmem:[%s1155 + $0x48] sm:$0xff]
  %v1166 = vld [vmem:[%s1155 + $0x50] sm:$0xff]
  %v1167 = vld [vmem:[%s1155 + $0x58] sm:$0xff]
  %v1168 = vld [vmem:[%s1155 + $0x60] sm:$0xff]
  %v1169 = vld [vmem:[%s1155 + $0x68] sm:$0xff]
  %v1170 = vld [vmem:[%s1155 + $0x70] sm:$0xff]
  %v1171 = vld [vmem:[%s1155 + $0x78] sm:$0xff]
  %v1172 = vld [vmem:[%s1155 + $0x80] sm:$0xff]
  %v1173 = vld [vmem:[%s1155 + $0x88] sm:$0xff]
  %v1174 = vld [vmem:[%s1155 + $0x90] sm:$0xff]
  %v1175 = vld [vmem:[%s1155 + $0x98] sm:$0xff]
  %v1176 = vld [vmem:[%s1155 + $0xa0] sm:$0xff]
  %v1177 = vld [vmem:[%s1155 + $0xa8] sm:$0xff]
  %v1178 = vld [vmem:[%s1155 + $0xb0] sm:$0xff]
  %v1179 = vld [vmem:[%s1155 + $0xb8] sm:$0xff]
  %v1180 = vld [vmem:[%s1155 + $0xc0] sm:$0xff]
  %v1181 = vld [vmem:[%s1155 + $0xc8] sm:$0xff]
  %v1182 = vld [vmem:[%s1155 + $0xd0] sm:$0xff]
  %v1183 = vld [vmem:[%s1155 + $0xd8] sm:$0xff]
  %v1184 = vld [vmem:[%s1155 + $0xe0] sm:$0xff]
  %v1185 = vld [vmem:[%s1155 + $0xe8] sm:$0xff]
  %v1186 = vld [vmem:[%s1155 + $0xf0] sm:$0xff]
  %v1187 = vld [vmem:[%s1155 + $0xf8] sm:$0xff]
  %v1188 = vld [vmem:[%s1155 + $0x100] sm:$0xff]
  %v1189 = vld [vmem:[%s1155 + $0x108] sm:$0xff]
  %v1190 = vld [vmem:[%s1155 + $0x110] sm:$0xff]
  %v1191 = vld [vmem:[%s1155 + $0x118] sm:$0xff]
  %v1192 = vld [vmem:[%s1155 + $0x120] sm:$0xff]
  %v1193 = vld [vmem:[%s1155 + $0x128] sm:$0xff]
  %v1194 = vld [vmem:[%s1155 + $0x130] sm:$0xff]
  %v1195 = vld [vmem:[%s1155 + $0x138] sm:$0xff]
  %v1196 = vld [vmem:[%s1155 + $0x140] sm:$0xff]
  %v1197 = vld [vmem:[%s1155 + $0x148] sm:$0xff]
  %v1198 = vld [vmem:[%s1155 + $0x150] sm:$0xff]
  %v1199 = vld [vmem:[%s1155 + $0x158] sm:$0xff]
  %v1200 = vld [vmem:[%s1155 + $0x160] sm:$0xff]
  %v1201 = vld [vmem:[%s1155 + $0x168] sm:$0xff]
  %v1202 = vld [vmem:[%s1155 + $0x170] sm:$0xff]
  %v1203 = vld [vmem:[%s1155 + $0x178] sm:$0xff]
  %v1204 = vld [vmem:[%s1155 + $0x180] sm:$0xff]
  %v1205 = vld [vmem:[%s1155 + $0x188] sm:$0xff]
  %v1206 = vld [vmem:[%s1155 + $0x190] sm:$0xff]
  %v1207 = vld [vmem:[%s1155 + $0x198] sm:$0xff]
  %v1208 = vld [vmem:[%s1155 + $0x1a0] sm:$0xff]
  %v1209 = vld [vmem:[%s1155 + $0x1a8] sm:$0xff]
  %v1210 = vld [vmem:[%s1155 + $0x1b0] sm:$0xff]
  %v1211 = vld [vmem:[%s1155 + $0x1b8] sm:$0x1]
  %v1213 = vsel %vm105, %v1211, 0
  %1215 = vmatpush.msra.mxu0 %v1171
  %1216 = vmatpush.msra.mxu0 %v1170
  %1217 = vmatpush.msra.mxu0 %v1169
  %1218 = vmatpush.msra.mxu0 %v1168
  %1219 = vmatpush.msra.mxu0 %v1167
  %1220 = vmatpush.msra.mxu0 %v1166
  %1221 = vmatpush.msra.mxu0 %v1165
  %1222 = vmatpush.msra.mxu0 %v1164
  %1223 = vmatpush.msra.mxu0 %v1163
  %1224 = vmatpush.msra.mxu0 %v1162
  %1225 = vmatpush.msra.mxu0 %v1161
  %1226 = vmatpush.msra.mxu0 %v1160
  %1227 = vmatpush.msra.mxu0 %v1159
  %1228 = vmatpush.msra.mxu0 %v1158
  %1229 = vmatpush.msra.mxu0 %v1157
  %1230 = vmatpush.msra.mxu0 %v1156
  %1231 = vmatmul.f32.gmra.mxu0 %v20
  %v1232 = vpop.f32.mrf.mxu0
  %v1233 = vadd.f32 %v91, %v1232
  %1234 = vmatmul.f32.gmra.mxu0 %v24
  %v1235 = vpop.f32.mrf.mxu0
  %v1236 = vadd.f32 %v96, %v1235
  %1237 = vdwg.mxu0
  %1238 = vmatpush.msra.mxu0 %v1187
  %1239 = vmatpush.msra.mxu0 %v1186
  %1240 = vmatpush.msra.mxu0 %v1185
  %1241 = vmatpush.msra.mxu0 %v1184
  %1242 = vmatpush.msra.mxu0 %v1183
  %1243 = vmatpush.msra.mxu0 %v1182
  %1244 = vmatpush.msra.mxu0 %v1181
  %1245 = vmatpush.msra.mxu0 %v1180
  %1246 = vmatpush.msra.mxu0 %v1179
  %1247 = vmatpush.msra.mxu0 %v1178
  %1248 = vmatpush.msra.mxu0 %v1177
  %1249 = vmatpush.msra.mxu0 %v1176
  %1250 = vmatpush.msra.mxu0 %v1175
  %1251 = vmatpush.msra.mxu0 %v1174
  %1252 = vmatpush.msra.mxu0 %v1173
  %1253 = vmatpush.msra.mxu0 %v1172
  %1254 = vmatmul.f32.gmra.mxu0 %v21
  %v1255 = vpop.f32.mrf.mxu0
  %v1256 = vadd.f32 %v1233, %v1255
  %1257 = vmatmul.f32.gmra.mxu0 %v25
  %v1258 = vpop.f32.mrf.mxu0
  %v1259 = vadd.f32 %v1236, %v1258
  %1260 = vdwg.mxu0
  %1261 = vmatpush.msra.mxu0 %v1203
  %1262 = vmatpush.msra.mxu0 %v1202
  %1263 = vmatpush.msra.mxu0 %v1201
  %1264 = vmatpush.msra.mxu0 %v1200
  %1265 = vmatpush.msra.mxu0 %v1199
  %1266 = vmatpush.msra.mxu0 %v1198
  %1267 = vmatpush.msra.mxu0 %v1197
  %1268 = vmatpush.msra.mxu0 %v1196
  %1269 = vmatpush.msra.mxu0 %v1195
  %1270 = vmatpush.msra.mxu0 %v1194
  %1271 = vmatpush.msra.mxu0 %v1193
  %1272 = vmatpush.msra.mxu0 %v1192
  %1273 = vmatpush.msra.mxu0 %v1191
  %1274 = vmatpush.msra.mxu0 %v1190
  %1275 = vmatpush.msra.mxu0 %v1189
  %1276 = vmatpush.msra.mxu0 %v1188
  %1277 = vmatmul.f32.gmra.mxu0 %v22
  %v1278 = vpop.f32.mrf.mxu0
  %v1279 = vadd.f32 %v1256, %v1278
  %1280 = vmatmul.f32.gmra.mxu0 %v26
  %v1281 = vpop.f32.mrf.mxu0
  %v1282 = vadd.f32 %v1259, %v1281
  %1283 = vdwg.mxu0
  %1284 = vmatpush.msra.mxu0 0.0
  %1285 = vmatpush.msra.mxu0 0.0
  %1286 = vmatpush.msra.mxu0 0.0
  %1287 = vmatpush.msra.mxu0 0.0
  %1288 = vmatpush.msra.mxu0 0.0
  %1289 = vmatpush.msra.mxu0 0.0
  %1290 = vmatpush.msra.mxu0 0.0
  %1291 = vmatpush.msra.mxu0 0.0
  %1292 = vmatpush.msra.mxu0 %v1213
  %1293 = vmatpush.msra.mxu0 %v1210
  %1294 = vmatpush.msra.mxu0 %v1209
  %1295 = vmatpush.msra.mxu0 %v1208
  %1296 = vmatpush.msra.mxu0 %v1207
  %1297 = vmatpush.msra.mxu0 %v1206
  %1298 = vmatpush.msra.mxu0 %v1205
  %1299 = vmatpush.msra.mxu0 %v1204
  %1300 = vmatmul.f32.gmra.mxu0 %v100
  %v1301 = vpop.f32.mrf.mxu0
  %v1302 = vadd.f32 %v1279, %v1301
  %1303 = vmatmul.f32.gmra.mxu0 %v103
  %v1304 = vpop.f32.mrf.mxu0
  %v1305 = vadd.f32 %v1282, %v1304
  %1306 = vdwg.mxu0
  %v1307 = vmul.f32 %v1302, %v1302
  %v1308 = vmul.f32 %v1305, %v1305
  %v1309 = vmul.f32 %v1302, 0.005589375
  %v1310 = vmul.f32 %v1305, 0.005589375
  %v1311 = vmul.f32 %v1307, %v1309
  %v1312 = vmul.f32 %v1308, %v1310
  %v1313 = vld [vmem:[%s3] sm:$0xff]
  %v1314 = vld [vmem:[%s3 + $0x8] sm:$0x1]
  %vm1315 = vcmask 72704
  %v1317 = vsel %vm1315, %v1313, 0
  %v1320 = vsel %vm1315, %v1314, 0
  %v1323 = vsel %vm105, %v838, 0
  %1325 = vmatpush.msra.mxu0 0.0
  %1326 = vmatpush.msra.mxu0 0.0
  %1327 = vmatpush.msra.mxu0 0.0
  %1328 = vmatpush.msra.mxu0 0.0
  %1329 = vmatpush.msra.mxu0 0.0
  %1330 = vmatpush.msra.mxu0 0.0
  %1331 = vmatpush.msra.mxu0 0.0
  %1332 = vmatpush.msra.mxu0 0.0
  %1333 = vmatpush.msra.mxu0 0.0
  %1334 = vmatpush.msra.mxu0 0.0
  %1335 = vmatpush.msra.mxu0 0.0
  %1336 = vmatpush.msra.mxu0 0.0
  %1337 = vmatpush.msra.mxu0 0.0
  %1338 = vmatpush.msra.mxu0 0.0
  %1339 = vmatpush.msra.mxu0 %v1323
  %1340 = vmatpush.msra.mxu0 %v837
  %1341 = vmatmul.f32.gmra.mxu0 %v1317
  %v1342 = vpop.f32.mrf.mxu0
  %v1343 = vadd.f32 0.0, %v1342
  %1344 = vmatmul.f32.gmra.mxu0 %v1320
  %v1345 = vpop.f32.mrf.mxu0
  %v1346 = vadd.f32 0.0, %v1345
  %1347 = vdwg.mxu0
  %1349 = vset.pattern.permute.xlu0 0
  %1350 = vperm.xlu0 %1349, %v30
  %v1351 = vpop.permute.xlu0 %1350
  %1354 = vset.pattern.permute.xlu0 0
  %1355 = vperm.xlu0 %1354, %v31
  %v1356 = vpop.permute.xlu0 %1355
  %v1358 = vadd.f32 %v1351, %v1343
  %v1359 = vadd.f32 %v1356, %v1346
  %v1360 = vadd.f32 %v205, %v1358
  %v1361 = vadd.f32 %v206, %v1359
  %v1362 = vmul.f32 %v1360, 0.7978846
  %v1363 = vmul.f32 %v1361, 0.7978846
  %v1364 = vtanh.pop %v1362
  %v1365 = vtanh.pop %v1363
  %v1366 = vadd.f32 %v1364, 1.0
  %v1367 = vadd.f32 %v1365, 1.0
  %v1368 = vmul.f32 %v1366, %v1366
  %v1369 = vmul.f32 %v1367, %v1367
  %vm1370 = vcmask 261120
  %1371 = vst.msk [vmem:[%s5] sm:$0xff] %vm1370, %v1368
  %vm1372 = vcmask 253952
  %1373 = vst.msk [vmem:[%s5 + $0x8] sm:$0x1] %vm1372, %v1369
  %s1374 = scalar_lea.vmem %s3, 64
  %v1375 = vld [vmem:[%s1374] sm:$0xff]
  %v1376 = vld [vmem:[%s1374 + $0x8] sm:$0x1]
  %v1378 = vsel %vm1315, %v1375, 0
  %v1381 = vsel %vm1315, %v1376, 0
  %1383 = vmatpush.msra.mxu0 0.0
  %1384 = vmatpush.msra.mxu0 0.0
  %1385 = vmatpush.msra.mxu0 0.0
  %1386 = vmatpush.msra.mxu0 0.0
  %1387 = vmatpush.msra.mxu0 0.0
  %1388 = vmatpush.msra.mxu0 0.0
  %1389 = vmatpush.msra.mxu0 0.0
  %1390 = vmatpush.msra.mxu0 0.0
  %1391 = vmatpush.msra.mxu0 0.0
  %1392 = vmatpush.msra.mxu0 0.0
  %1393 = vmatpush.msra.mxu0 0.0
  %1394 = vmatpush.msra.mxu0 0.0
  %1395 = vmatpush.msra.mxu0 0.0
  %1396 = vmatpush.msra.mxu0 0.0
  %1397 = vmatpush.msra.mxu0 %v1323
  %1398 = vmatpush.msra.mxu0 %v837
  %1399 = vmatmul.f32.gmra.mxu0 %v1378
  %v1400 = vpop.f32.mrf.mxu0
  %v1401 = vadd.f32 0.0, %v1400
  %1402 = vmatmul.f32.gmra.mxu0 %v1381
  %v1403 = vpop.f32.mrf.mxu0
  %v1404 = vadd.f32 0.0, %v1403
  %1405 = vdwg.mxu0
  %v1406 = vadd.f32 %v1351, %v1401
  %v1407 = vadd.f32 %v1356, %v1404
  %s1408 = scalar_lea.vmem %s3, 80
  %v1409 = vld [vmem:[%s1408] sm:$0xff]
  %v1410 = vld [vmem:[%s1408 + $0x8] sm:$0x1]
  %v1412 = vsel %vm1315, %v1409, 0
  %v1415 = vsel %vm1315, %v1410, 0
  %v1418 = vsel %vm105, %v996, 0
  %1420 = vmatpush.msra.mxu0 0.0
  %1421 = vmatpush.msra.mxu0 0.0
  %1422 = vmatpush.msra.mxu0 0.0
  %1423 = vmatpush.msra.mxu0 0.0
  %1424 = vmatpush.msra.mxu0 0.0
  %1425 = vmatpush.msra.mxu0 0.0
  %1426 = vmatpush.msra.mxu0 0.0
  %1427 = vmatpush.msra.mxu0 0.0
  %1428 = vmatpush.msra.mxu0 0.0
  %1429 = vmatpush.msra.mxu0 0.0
  %1430 = vmatpush.msra.mxu0 0.0
  %1431 = vmatpush.msra.mxu0 0.0
  %1432 = vmatpush.msra.mxu0 0.0
  %1433 = vmatpush.msra.mxu0 0.0
  %1434 = vmatpush.msra.mxu0 %v1418
  %1435 = vmatpush.msra.mxu0 %v995
  %1436 = vmatmul.f32.gmra.mxu0 %v1412
  %v1437 = vpop.f32.mrf.mxu0
  %v1438 = vadd.f32 0.0, %v1437
  %1439 = vmatmul.f32.gmra.mxu0 %v1415
  %v1440 = vpop.f32.mrf.mxu0
  %v1441 = vadd.f32 0.0, %v1440
  %1442 = vdwg.mxu0
  %v1443 = vadd.f32 %v1406, %v1438
  %v1444 = vadd.f32 %v1407, %v1441
  %v1445 = vadd.f32 %v363, %v1443
  %v1446 = vadd.f32 %v364, %v1444
  %v1447 = vmul.f32 %v1445, 0.7978846
  %v1448 = vmul.f32 %v1446, 0.7978846
  %v1449 = vtanh.pop %v1447
  %v1450 = vtanh.pop %v1448
  %v1451 = vadd.f32 %v1449, 1.0
  %v1452 = vadd.f32 %v1450, 1.0
  %v1453 = vmul.f32 %v1451, %v1451
  %v1454 = vmul.f32 %v1452, %v1452
  %s1455 = scalar_lea.vmem %s5, 16
  %1456 = vst.msk [vmem:[%s1455] sm:$0xff] %vm1370, %v1453
  %1457 = vst.msk [vmem:[%s1455 + $0x8] sm:$0x1] %vm1372, %v1454
  %s1458 = scalar_lea.vmem %s3, 128
  %v1459 = vld [vmem:[%s1458] sm:$0xff]
  %v1460 = vld [vmem:[%s1458 + $0x8] sm:$0x1]
  %v1462 = vsel %vm1315, %v1459, 0
  %v1465 = vsel %vm1315, %v1460, 0
  %1467 = vmatpush.msra.mxu0 0.0
  %1468 = vmatpush.msra.mxu0 0.0
  %1469 = vmatpush.msra.mxu0 0.0
  %1470 = vmatpush.msra.mxu0 0.0
  %1471 = vmatpush.msra.mxu0 0.0
  %1472 = vmatpush.msra.mxu0 0.0
  %1473 = vmatpush.msra.mxu0 0.0
  %1474 = vmatpush.msra.mxu0 0.0
  %1475 = vmatpush.msra.mxu0 0.0
  %1476 = vmatpush.msra.mxu0 0.0
  %1477 = vmatpush.msra.mxu0 0.0
  %1478 = vmatpush.msra.mxu0 0.0
  %1479 = vmatpush.msra.mxu0 0.0
  %1480 = vmatpush.msra.mxu0 0.0
  %1481 = vmatpush.msra.mxu0 %v1323
  %1482 = vmatpush.msra.mxu0 %v837
  %1483 = vmatmul.f32.gmra.mxu0 %v1462
  %v1484 = vpop.f32.mrf.mxu0
  %v1485 = vadd.f32 0.0, %v1484
  %1486 = vmatmul.f32.gmra.mxu0 %v1465
  %v1487 = vpop.f32.mrf.mxu0
  %v1488 = vadd.f32 0.0, %v1487
  %1489 = vdwg.mxu0
  %v1490 = vadd.f32 %v1351, %v1485
  %v1491 = vadd.f32 %v1356, %v1488
  %s1492 = scalar_lea.vmem %s3, 160
  %v1493 = vld [vmem:[%s1492] sm:$0xff]
  %v1494 = vld [vmem:[%s1492 + $0x8] sm:$0x1]
  %v1496 = vsel %vm1315, %v1493, 0
  %v1499 = vsel %vm1315, %v1494, 0
  %v1502 = vsel %vm105, %v1154, 0
  %1504 = vmatpush.msra.mxu0 0.0
  %1505 = vmatpush.msra.mxu0 0.0
  %1506 = vmatpush.msra.mxu0 0.0
  %1507 = vmatpush.msra.mxu0 0.0
  %1508 = vmatpush.msra.mxu0 0.0
  %1509 = vmatpush.msra.mxu0 0.0
  %1510 = vmatpush.msra.mxu0 0.0
  %1511 = vmatpush.msra.mxu0 0.0
  %1512 = vmatpush.msra.mxu0 0.0
  %1513 = vmatpush.msra.mxu0 0.0
  %1514 = vmatpush.msra.mxu0 0.0
  %1515 = vmatpush.msra.mxu0 0.0
  %1516 = vmatpush.msra.mxu0 0.0
  %1517 = vmatpush.msra.mxu0 0.0
  %1518 = vmatpush.msra.mxu0 %v1502
  %1519 = vmatpush.msra.mxu0 %v1153
  %1520 = vmatmul.f32.gmra.mxu0 %v1496
  %v1521 = vpop.f32.mrf.mxu0
  %v1522 = vadd.f32 0.0, %v1521
  %1523 = vmatmul.f32.gmra.mxu0 %v1499
  %v1524 = vpop.f32.mrf.mxu0
  %v1525 = vadd.f32 0.0, %v1524
  %1526 = vdwg.mxu0
  %v1527 = vadd.f32 %v1490, %v1522
  %v1528 = vadd.f32 %v1491, %v1525
  %v1529 = vadd.f32 %v521, %v1527
  %v1530 = vadd.f32 %v522, %v1528
  %v1531 = vmul.f32 %v1529, 0.7978846
  %v1532 = vmul.f32 %v1530, 0.7978846
  %v1533 = vtanh.pop %v1531
  %v1534 = vtanh.pop %v1532
  %v1535 = vadd.f32 %v1533, 1.0
  %v1536 = vadd.f32 %v1534, 1.0
  %v1537 = vmul.f32 %v1535, %v1535
  %v1538 = vmul.f32 %v1536, %v1536
  %s1539 = scalar_lea.vmem %s5, 32
  %1540 = vst.msk [vmem:[%s1539] sm:$0xff] %vm1370, %v1537
  %1541 = vst.msk [vmem:[%s1539 + $0x8] sm:$0x1] %vm1372, %v1538
  %s1542 = scalar_lea.vmem %s3, 192
  %v1543 = vld [vmem:[%s1542] sm:$0xff]
  %v1544 = vld [vmem:[%s1542 + $0x8] sm:$0x1]
  %v1546 = vsel %vm1315, %v1543, 0
  %v1549 = vsel %vm1315, %v1544, 0
  %1551 = vmatpush.msra.mxu0 0.0
  %1552 = vmatpush.msra.mxu0 0.0
  %1553 = vmatpush.msra.mxu0 0.0
  %1554 = vmatpush.msra.mxu0 0.0
  %1555 = vmatpush.msra.mxu0 0.0
  %1556 = vmatpush.msra.mxu0 0.0
  %1557 = vmatpush.msra.mxu0 0.0
  %1558 = vmatpush.msra.mxu0 0.0
  %1559 = vmatpush.msra.mxu0 0.0
  %1560 = vmatpush.msra.mxu0 0.0
  %1561 = vmatpush.msra.mxu0 0.0
  %1562 = vmatpush.msra.mxu0 0.0
  %1563 = vmatpush.msra.mxu0 0.0
  %1564 = vmatpush.msra.mxu0 0.0
  %1565 = vmatpush.msra.mxu0 %v1323
  %1566 = vmatpush.msra.mxu0 %v837
  %1567 = vmatmul.f32.gmra.mxu0 %v1546
  %v1568 = vpop.f32.mrf.mxu0
  %v1569 = vadd.f32 0.0, %v1568
  %1570 = vmatmul.f32.gmra.mxu0 %v1549
  %v1571 = vpop.f32.mrf.mxu0
  %v1572 = vadd.f32 0.0, %v1571
  %1573 = vdwg.mxu0
  %v1574 = vadd.f32 %v1351, %v1569
  %v1575 = vadd.f32 %v1356, %v1572
  %s1576 = scalar_lea.vmem %s3, 208
  %v1577 = vld [vmem:[%s1576] sm:$0xff]
  %v1578 = vld [vmem:[%s1576 + $0x8] sm:$0x1]
  %v1580 = vsel %vm1315, %v1577, 0
  %v1583 = vsel %vm1315, %v1578, 0
  %1585 = vmatpush.msra.mxu0 0.0
  %1586 = vmatpush.msra.mxu0 0.0
  %1587 = vmatpush.msra.mxu0 0.0
  %1588 = vmatpush.msra.mxu0 0.0
  %1589 = vmatpush.msra.mxu0 0.0
  %1590 = vmatpush.msra.mxu0 0.0
  %1591 = vmatpush.msra.mxu0 0.0
  %1592 = vmatpush.msra.mxu0 0.0
  %1593 = vmatpush.msra.mxu0 0.0
  %1594 = vmatpush.msra.mxu0 0.0
  %1595 = vmatpush.msra.mxu0 0.0
  %1596 = vmatpush.msra.mxu0 0.0
  %1597 = vmatpush.msra.mxu0 0.0
  %1598 = vmatpush.msra.mxu0 0.0
  %1599 = vmatpush.msra.mxu0 %v1418
  %1600 = vmatpush.msra.mxu0 %v995
  %1601 = vmatmul.f32.gmra.mxu0 %v1580
  %v1602 = vpop.f32.mrf.mxu0
  %v1603 = vadd.f32 0.0, %v1602
  %1604 = vmatmul.f32.gmra.mxu0 %v1583
  %v1605 = vpop.f32.mrf.mxu0
  %v1606 = vadd.f32 0.0, %v1605
  %1607 = vdwg.mxu0
  %v1608 = vadd.f32 %v1574, %v1603
  %v1609 = vadd.f32 %v1575, %v1606
  %s1610 = scalar_lea.vmem %s3, 224
  %v1611 = vld [vmem:[%s1610] sm:$0xff]
  %v1612 = vld [vmem:[%s1610 + $0x8] sm:$0x1]
  %v1614 = vsel %vm1315, %v1611, 0
  %v1617 = vsel %vm1315, %v1612, 0
  %1619 = vmatpush.msra.mxu0 0.0
  %1620 = vmatpush.msra.mxu0 0.0
  %1621 = vmatpush.msra.mxu0 0.0
  %1622 = vmatpush.msra.mxu0 0.0
  %1623 = vmatpush.msra.mxu0 0.0
  %1624 = vmatpush.msra.mxu0 0.0
  %1625 = vmatpush.msra.mxu0 0.0
  %1626 = vmatpush.msra.mxu0 0.0
  %1627 = vmatpush.msra.mxu0 0.0
  %1628 = vmatpush.msra.mxu0 0.0
  %1629 = vmatpush.msra.mxu0 0.0
  %1630 = vmatpush.msra.mxu0 0.0
  %1631 = vmatpush.msra.mxu0 0.0
  %1632 = vmatpush.msra.mxu0 0.0
  %1633 = vmatpush.msra.mxu0 %v1502
  %1634 = vmatpush.msra.mxu0 %v1153
  %1635 = vmatmul.f32.gmra.mxu0 %v1614
  %v1636 = vpop.f32.mrf.mxu0
  %v1637 = vadd.f32 0.0, %v1636
  %1638 = vmatmul.f32.gmra.mxu0 %v1617
  %v1639 = vpop.f32.mrf.mxu0
  %v1640 = vadd.f32 0.0, %v1639
  %1641 = vdwg.mxu0
  %v1642 = vadd.f32 %v1608, %v1637
  %v1643 = vadd.f32 %v1609, %v1640
  %s1644 = scalar_lea.vmem %s3, 240
  %v1645 = vld [vmem:[%s1644] sm:$0xff]
  %v1646 = vld [vmem:[%s1644 + $0x8] sm:$0x1]
  %v1648 = vsel %vm1315, %v1645, 0
  %v1651 = vsel %vm1315, %v1646, 0
  %v1654 = vsel %vm105, %v1312, 0
  %1656 = vmatpush.msra.mxu0 0.0
  %1657 = vmatpush.msra.mxu0 0.0
  %1658 = vmatpush.msra.mxu0 0.0
  %1659 = vmatpush.msra.mxu0 0.0
  %1660 = vmatpush.msra.mxu0 0.0
  %1661 = vmatpush.msra.mxu0 0.0
  %1662 = vmatpush.msra.mxu0 0.0
  %1663 = vmatpush.msra.mxu0 0.0
  %1664 = vmatpush.msra.mxu0 0.0
  %1665 = vmatpush.msra.mxu0 0.0
  %1666 = vmatpush.msra.mxu0 0.0
  %1667 = vmatpush.msra.mxu0 0.0
  %1668 = vmatpush.msra.mxu0 0.0
  %1669 = vmatpush.msra.mxu0 0.0
  %1670 = vmatpush.msra.mxu0 %v1654
  %1671 = vmatpush.msra.mxu0 %v1311
  %1672 = vmatmul.f32.gmra.mxu0 %v1648
  %v1673 = vpop.f32.mrf.mxu0
  %v1674 = vadd.f32 0.0, %v1673
  %1675 = vmatmul.f32.gmra.mxu0 %v1651
  %v1676 = vpop.f32.mrf.mxu0
  %v1677 = vadd.f32 0.0, %v1676
  %1678 = vdwg.mxu0
  %v1679 = vadd.f32 %v1642, %v1674
  %v1680 = vadd.f32 %v1643, %v1677
  %v1681 = vadd.f32 %v679, %v1679
  %v1682 = vadd.f32 %v680, %v1680
  %v1683 = vmul.f32 %v1681, 0.7978846
  %v1684 = vmul.f32 %v1682, 0.7978846
  %v1685 = vtanh.pop %v1683
  %v1686 = vtanh.pop %v1684
  %v1687 = vadd.f32 %v1685, 1.0
  %v1688 = vadd.f32 %v1686, 1.0
  %v1689 = vmul.f32 %v1687, %v1687
  %v1690 = vmul.f32 %v1688, %v1688
  %s1691 = scalar_lea.vmem %s5, 48
  %1692 = vst.msk [vmem:[%s1691] sm:$0xff] %vm1370, %v1689
  %1693 = vst.msk [vmem:[%s1691 + $0x8] sm:$0x1] %vm1372, %v1690
  // Predicated region
  $region22: #{model_forward.1} parent=0 // pred_check
    _
  $region23: #{model_forward.1} parent=0 // pred_check_branch
    %1695 = sbr.rel (0) target = $region25
  $region24: #{model_forward.1} parent=0 // pred_region
    _
  $region25: #{model_forward.1} parent=0 // pred_fallthru
    _
  // Predicated region
  $region26: #{model_forward.1} parent=0 // pred_check
    _
  $region27: #{model_forward.1} parent=0 // pred_check_branch
    %1697 = sbr.rel (0) target = $region29
  $region28: #{model_forward.1} parent=0 // pred_region
    _
  $region29: #{model_forward.1} parent=0 // pred_fallthru
    _

</llo_original>
